<compile_context>
chip_gen: v6e
topology: v6e:2x2x1
jax: 0.10.0
libtpu: 0.0.40
codegen_flags: <defaults>
</compile_context>

<pallas_src>
import functools

import jax
import jax.numpy as jnp
from jax.experimental import pallas as pl
from jax.experimental.pallas import tpu as pltpu

PAD = 8  # sublane-aligned zero padding on each side of x1p for the band rolls


def swd_kernel(x1_ref, w1t_ref, b1_ref, w2_ref, b2_ref, x2t_ref, gatt_ref,
               out_ref, pad_ref, *, len_reqd):
    # ---- x1 side: lin1 + banded-mask matmul.  Recomputed per step (cheap, ~4
    # MFLOP) so there is no cross-step scratch carry and the B2 grid axis can be
    # sharded across TensorCores on v7x. --------------------------------------
    # x1p = x1 @ w1^T + b1 : (B1, T1) @ (T1, emb) -> (B1, emb), f32 accumulate.
    x1p = jnp.dot(x1_ref[...], w1t_ref[...],
                  preferred_element_type=jnp.float32) + b1_ref[...]
    t1, emb = x1p.shape

    # banded = band_mask(T2, T1) @ x1p, computed as a sum of sublane rolls of a
    # zero-padded copy of x1p (mask matrix never built, no extra MXU/HBM work).
    zeros_strip = jnp.zeros((PAD, emb), jnp.float32)
    pad_ref[pl.ds(0, PAD), :] = zeros_strip
    pad_ref[pl.ds(PAD + t1, PAD), :] = zeros_strip
    pad_ref[pl.ds(PAD, t1), :] = x1p
    padded = pad_ref[...]
    length = padded.shape[0]
    acc = padded                                  # the shift == 0 term
    for d in range(-(len_reqd - 1), len_reqd):
        if d == 0:
            continue
        acc = acc + pltpu.roll(padded, shift=d % length, axis=0)
    t2 = out_ref.shape[0]
    banded = acc[PAD:PAD + t2, :].astype(jnp.bfloat16)   # (T2, emb), bf16 operand

    # ---- x2 side, computed directly in transposed (emb, TB2) layout so both
    # per-step matmuls consume a canonical (K, N) right-hand side. ------------
    # x2p^T = w2 @ x2^T + b2 : (emb, T2) @ (T2, TB2) -> (emb, TB2), f32 acc.
    x2pT = jnp.dot(w2_ref[...], x2t_ref[...],
                   preferred_element_type=jnp.float32) + b2_ref[...]
    x2pT = x2pT.astype(jnp.bfloat16)

    # local tile = banded (T2, emb) @ x2p^T (emb, TB2) -> (T2, TB2), f32 acc.
    local = jnp.dot(banded, x2pT, preferred_element_type=jnp.float32)

    lg = local + gatt_ref[...].astype(jnp.float32)

    # Softmax over dim 0 (the full T2 extent is resident in this block).
    m = jnp.max(lg, axis=0, keepdims=True)
    e = jnp.exp(lg - m)
    s = jnp.sum(e, axis=0, keepdims=True)
    out_ref[...] = (e * pl.reciprocal(s, approx=True)).astype(out_ref.dtype)


def swd_forward(x1, x2, w1, b1, w2, b2, gatt, *, w=6, block_b2=None):
    """x1:(B1,T1) x2:(B2,T2) w1:(emb,T1) b1:(emb,) w2:(emb,T2) b2:(emb,)
       gatt:(T2,T1).  Returns the column-softmax output (T2, B2) in f32."""
    B1, T1 = x1.shape
    B2, T2 = x2.shape
    emb = w1.shape[0]
    assert B1 == T1 and B2 == T1, "PyTorch forward only shape-checks when B1 == B2 == T1"
    # TODO(synk): the roll-based band path assumes the square case T1 == T2 (the
    # module default); a rectangular mask would need a dense in-kernel fallback.
    assert T1 == T2
    assert w // 2 <= PAD, "band half-width must stay inside the zero padding"
    if block_b2 is None:
        # Single grid step at the test shapes; 256-wide tiles also keep the
        # v6e/v7x 256-column MXU fully occupied when B2 is larger.
        block_b2 = min(B2, 256)
    assert B2 % block_b2 == 0 and block_b2 % 128 == 0

    x1_bf = x1.astype(jnp.bfloat16)
    w1t_bf = w1.astype(jnp.bfloat16).T            # (T1, emb), one-time wrapper transpose
    w2_bf = w2.astype(jnp.bfloat16)               # (emb, T2), native layout is already (M, K)
    x2t_bf = x2.astype(jnp.bfloat16).T            # (T2, B2), one-time wrapper transpose
    b1_2d = b1.reshape(1, emb).astype(jnp.float32)
    b2_2d = b2.reshape(emb, 1).astype(jnp.float32)
    gatt_bf = gatt.astype(jnp.bfloat16)           # halves the largest HBM read

    kernel = functools.partial(swd_kernel, len_reqd=w // 2)

    # NOTE(v7x VMEM scaling): if T1/T2 grow well beyond 256, consider
    # pipeline_mode=pl.Buffered(1) on the invariant in_specs to avoid
    # double-buffering the resident blocks in the smaller 64 MiB VMEM.
    return pl.pallas_call(
        kernel,
        out_shape=jax.ShapeDtypeStruct((T2, B2), jnp.float32),
        grid_spec=pltpu.PrefetchScalarGridSpec(
            num_scalar_prefetch=0,
            grid=(B2 // block_b2,),
            in_specs=[
                pl.BlockSpec((B1, T1), lambda j: (0, 0)),          # x1 (resident)
                pl.BlockSpec((T1, emb), lambda j: (0, 0)),         # w1^T (resident)
                pl.BlockSpec((1, emb), lambda j: (0, 0)),          # b1 row
                pl.BlockSpec((emb, T2), lambda j: (0, 0)),         # w2 (resident)
                pl.BlockSpec((emb, 1), lambda j: (0, 0)),          # b2 column
                pl.BlockSpec((T2, block_b2), lambda j: (0, j)),    # x2^T column tile
                pl.BlockSpec((T2, block_b2), lambda j: (0, j)),    # gatt tile (bf16)
            ],
            out_specs=pl.BlockSpec((T2, block_b2), lambda j: (0, j)),
            scratch_shapes=[
                pltpu.VMEM((T1 + 2 * PAD, emb), jnp.float32),      # zero-padded x1p
            ],
        ),
        compiler_params=pltpu.CompilerParams(
            # Every grid step is independent (no step-0 caching any more), so the
            # B2 axis can be sharded across TensorCores on v7x.
            dimension_semantics=("parallel",),
            vmem_limit_bytes=32 * 1024 * 1024,
        ),
    )(x1_bf, w1t_bf, b1_2d, w2_bf, b2_2d, x2t_bf, gatt_bf)


def make_band_mask(T2, T1, w):
    """maskMat: diagonals -i..+i for i in range(w//2) set to 1."""
    len_reqd = w // 2
    rows = jnp.arange(T2)[:, None]
    cols = jnp.arange(T1)[None, :]
    return (jnp.abs(rows - cols) < len_reqd).astype(jnp.float32)


def reference_forward(x1, x2, w1, b1, w2, b2, mask, gatt):
    hi = jax.lax.Precision.HIGHEST
    x1p = jnp.dot(x1.astype(jnp.float32), w1.astype(jnp.float32).T, precision=hi) + b1
    x2p = jnp.dot(x2.astype(jnp.float32), w2.astype(jnp.float32).T, precision=hi) + b2
    dotted = jnp.dot(x1p, x2p.T, precision=hi)
    lg = jnp.dot(mask, dotted, precision=hi) + gatt
    return jax.nn.softmax(lg, axis=0)


if __name__ == "__main__":
    # Small shapes consistent with the decoder path: the forward only
    # shape-checks when B1 == B2 == T1, and the module default has T1 == T2.
    T1 = T2 = 256
    B1 = B2 = T1
    emb = 32
    w = 6

    key = jax.random.PRNGKey(0)
    k_x1, k_x2, k_w1, k_b1, k_w2, k_b2, k_g = jax.random.split(key, 7)

    # Activations / weights are fed to the MXU in bf16; round them once here so
    # the kernel and the f32 reference see identical values.
    x1 = jax.random.normal(k_x1, (B1, T1), jnp.float32).astype(jnp.bfloat16)
    x2 = jax.random.normal(k_x2, (B2, T2), jnp.float32).astype(jnp.bfloat16)

    # Deterministic parameter init (PyTorch-style uniform +/- 1/sqrt(fan_in)).
    bound1 = 1.0 / (T1 ** 0.5)
    bound2 = 1.0 / (T2 ** 0.5)
    w1 = jax.random.uniform(k_w1, (emb, T1), jnp.float32, -bound1, bound1).astype(jnp.bfloat16)
    b1 = jax.random.uniform(k_b1, (emb,),    jnp.float32, -bound1, bound1)
    w2 = jax.random.uniform(k_w2, (emb, T2), jnp.float32, -bound2, bound2).astype(jnp.bfloat16)
    b2 = jax.random.uniform(k_b2, (emb,),    jnp.float32, -bound2, bound2)

    # gloabalAtt = torch.randn((T2, T1)) -> deterministic precomputed noise kept
    # as an input so the result is checkable; streamed to the kernel in bf16, so
    # round it once here and give the reference the same rounded values.
    # TODO(synk): could be generated in-kernel with pltpu.prng_* if bit parity
    # with an externally supplied noise tensor is not required.
    gatt = jax.random.normal(k_g, (T2, T1), jnp.float32).astype(jnp.bfloat16)

    out = swd_forward(x1, x2, w1, b1, w2, b2, gatt, w=w)
    out = jax.block_until_ready(out)

    mask = make_band_mask(T2, T1, w)
    ref = reference_forward(x1, x2, w1, b1, w2, b2, mask, gatt.astype(jnp.float32))

    assert out.shape == (T2, B2)
    # The kernel rounds the (banded, x2p^T) intermediates to bf16 for the
    # full-rate MXU matmul; the reference keeps f32 throughout, hence the 1e-2
    # tolerance on the softmax probabilities.
    assert jnp.allclose(out, ref, atol=1e-2, rtol=1e-2), float(jnp.max(jnp.abs(out - ref)))
    # softmax columns sum to 1 (up to the approximate-reciprocal error)
    assert jnp.allclose(jnp.sum(out, axis=0), jnp.ones((B2,)), atol=5e-3)

    print("KERNEL_OK")
</pallas_src>

<mosaic_0001>
module attributes {stable_mosaic.version = 11 : i64} {
  func.func @swd_kernel(%arg0: i32, %arg1: memref<256x256xbf16, #tpu.memory_space<vmem>>, %arg2: memref<256x32xbf16, #tpu.memory_space<vmem>>, %arg3: memref<1x32xf32, #tpu.memory_space<vmem>>, %arg4: memref<32x256xbf16, #tpu.memory_space<vmem>>, %arg5: memref<32x1xf32, #tpu.memory_space<vmem>>, %arg6: memref<256x256xbf16, #tpu.memory_space<vmem>>, %arg7: memref<256x256xbf16, #tpu.memory_space<vmem>>, %arg8: memref<256x256xf32, #tpu.memory_space<vmem>>, %arg9: memref<272x32xf32, #tpu.memory_space<vmem>>) attributes {dimension_semantics = [#tpu.dimension_semantics<parallel>], iteration_bounds = array<i64: 1>, scalar_prefetch = 0 : i64, scratch_operands = 1 : i64, tpu.core_type = #tpu.core_type<tc>, window_params = [{pipeline_mode = #tpu.pipeline_mode<synchronous>, transform_indices = @transform_0, window_bounds = array<i64: 256, 256>}, {pipeline_mode = #tpu.pipeline_mode<synchronous>, transform_indices = @transform_1, window_bounds = array<i64: 256, 32>}, {pipeline_mode = #tpu.pipeline_mode<synchronous>, transform_indices = @transform_2, window_bounds = array<i64: 1, 32>}, {pipeline_mode = #tpu.pipeline_mode<synchronous>, transform_indices = @transform_3, window_bounds = array<i64: 32, 256>}, {pipeline_mode = #tpu.pipeline_mode<synchronous>, transform_indices = @transform_4, window_bounds = array<i64: 32, 1>}, {transform_indices = @transform_5, window_bounds = array<i64: 256, 256>}, {transform_indices = @transform_6, window_bounds = array<i64: 256, 256>}, {transform_indices = @transform_7, window_bounds = array<i64: 256, 256>}]} {
    %c0 = arith.constant 0 : index
    %c0_0 = arith.constant 0 : index
    %0 = vector.load %arg1[%c0, %c0_0] : memref<256x256xbf16, #tpu.memory_space<vmem>>, vector<256x256xbf16>
    %c0_1 = arith.constant 0 : index
    %c0_2 = arith.constant 0 : index
    %1 = vector.load %arg2[%c0_1, %c0_2] : memref<256x32xbf16, #tpu.memory_space<vmem>>, vector<256x32xbf16>
    %cst = arith.constant dense<0.000000e+00> : vector<256x32xf32>
    %2 = tpu.matmul %0, %1, %cst {dimension_numbers = #tpu.dot_dimension_numbers<[1], [0], [0], [1], [0, 0, 1, 1], [], []>} : vector<256x256xbf16>, vector<256x32xbf16>, vector<256x32xf32> -> vector<256x32xf32>
    %c0_3 = arith.constant 0 : index
    %c0_4 = arith.constant 0 : index
    %3 = vector.load %arg3[%c0_3, %c0_4] : memref<1x32xf32, #tpu.memory_space<vmem>>, vector<1x32xf32>
    %4 = vector.broadcast %3 : vector<1x32xf32> to vector<256x32xf32>
    %5 = arith.addf %2, %4 : vector<256x32xf32>
    %cst_5 = arith.constant 0.000000e+00 : f32
    %6 = vector.broadcast %cst_5 : f32 to vector<8x32xf32>
    %c0_6 = arith.constant 0 : index
    %c0_7 = arith.constant 0 : index
    %7 = vector.load %arg9[%c0_6, %c0_7] : memref<272x32xf32, #tpu.memory_space<vmem>>, vector<8x32xf32>
    tpu.vector_store %arg9[%c0_6, %c0_7], %6 {strides = array<i32>} : memref<272x32xf32, #tpu.memory_space<vmem>>, vector<8x32xf32>,
    %c264 = arith.constant 264 : index
    %c0_8 = arith.constant 0 : index
    %8 = vector.load %arg9[%c264, %c0_8] : memref<272x32xf32, #tpu.memory_space<vmem>>, vector<8x32xf32>
    tpu.vector_store %arg9[%c264, %c0_8], %6 {strides = array<i32>} : memref<272x32xf32, #tpu.memory_space<vmem>>, vector<8x32xf32>,
    %c8 = arith.constant 8 : index
    %c0_9 = arith.constant 0 : index
    %9 = vector.load %arg9[%c8, %c0_9] : memref<272x32xf32, #tpu.memory_space<vmem>>, vector<256x32xf32>
    tpu.vector_store %arg9[%c8, %c0_9], %5 {strides = array<i32>} : memref<272x32xf32, #tpu.memory_space<vmem>>, vector<256x32xf32>,
    %c0_10 = arith.constant 0 : index
    %c0_11 = arith.constant 0 : index
    %10 = vector.load %arg9[%c0_10, %c0_11] : memref<272x32xf32, #tpu.memory_space<vmem>>, vector<272x32xf32>
    %c270_i32 = arith.constant 270 : i32
    %11 = tpu.dynamic_rotate %10 by %c270_i32 dim 0 : vector<272x32xf32>, i32 -> vector<272x32xf32>
    %12 = arith.addf %10, %11 : vector<272x32xf32>
    %c271_i32 = arith.constant 271 : i32
    %13 = tpu.dynamic_rotate %10 by %c271_i32 dim 0 : vector<272x32xf32>, i32 -> vector<272x32xf32>
    %14 = arith.addf %12, %13 : vector<272x32xf32>
    %c1_i32 = arith.constant 1 : i32
    %15 = tpu.dynamic_rotate %10 by %c1_i32 dim 0 : vector<272x32xf32>, i32 -> vector<272x32xf32>
    %16 = arith.addf %14, %15 : vector<272x32xf32>
    %c2_i32 = arith.constant 2 : i32
    %17 = tpu.dynamic_rotate %10 by %c2_i32 dim 0 : vector<272x32xf32>, i32 -> vector<272x32xf32>
    %18 = arith.addf %16, %17 : vector<272x32xf32>
    %19 = vector.extract_strided_slice %18 {offsets = [8, 0], sizes = [256, 32], strides = [1, 1]} : vector<272x32xf32> to vector<256x32xf32>
    %20 = arith.truncf %19 : vector<256x32xf32> to vector<256x32xbf16>
    %c0_12 = arith.constant 0 : index
    %c0_13 = arith.constant 0 : index
    %21 = vector.load %arg4[%c0_12, %c0_13] : memref<32x256xbf16, #tpu.memory_space<vmem>>, vector<32x256xbf16>
    %c0_14 = arith.constant 0 : index
    %c0_15 = arith.constant 0 : index
    %22 = vector.load %arg6[%c0_14, %c0_15] : memref<256x256xbf16, #tpu.memory_space<vmem>>, vector<256x256xbf16>
    %cst_16 = arith.constant dense<0.000000e+00> : vector<32x256xf32>
    %23 = tpu.matmul %21, %22, %cst_16 {dimension_numbers = #tpu.dot_dimension_numbers<[1], [0], [0], [1], [0, 0, 1, 1], [], []>} : vector<32x256xbf16>, vector<256x256xbf16>, vector<32x256xf32> -> vector<32x256xf32>
    %c0_17 = arith.constant 0 : index
    %c0_18 = arith.constant 0 : index
    %24 = vector.load %arg5[%c0_17, %c0_18] : memref<32x1xf32, #tpu.memory_space<vmem>>, vector<32x1xf32>
    %25 = vector.broadcast %24 : vector<32x1xf32> to vector<32x256xf32>
    %26 = arith.addf %23, %25 : vector<32x256xf32>
    %27 = arith.truncf %26 : vector<32x256xf32> to vector<32x256xbf16>
    %cst_19 = arith.constant dense<0.000000e+00> : vector<256x256xf32>
    %28 = tpu.matmul %20, %27, %cst_19 {dimension_numbers = #tpu.dot_dimension_numbers<[1], [0], [0], [1], [0, 0, 1, 1], [], []>} : vector<256x32xbf16>, vector<32x256xbf16>, vector<256x256xf32> -> vector<256x256xf32>
    %c0_20 = arith.constant 0 : index
    %c0_21 = arith.constant 0 : index
    %29 = vector.load %arg7[%c0_20, %c0_21] : memref<256x256xbf16, #tpu.memory_space<vmem>>, vector<256x256xbf16>
    %30 = arith.extf %29 : vector<256x256xbf16> to vector<256x256xf32>
    %31 = arith.addf %28, %30 : vector<256x256xf32>
    %cst_22 = arith.constant dense<0xFF800000> : vector<256xf32>
    %32 = vector.multi_reduction <maximumf>, %31, %cst_22 [0] : vector<256x256xf32> to vector<256xf32>
    %33 = vector.shape_cast %32 : vector<256xf32> to vector<1x256xf32>
    %34 = vector.broadcast %33 : vector<1x256xf32> to vector<256x256xf32>
    %35 = arith.subf %31, %34 : vector<256x256xf32>
    %36 = math.exp %35 : vector<256x256xf32>
    %cst_23 = arith.constant dense<0.000000e+00> : vector<256xf32>
    %37 = vector.multi_reduction <add>, %36, %cst_23 [0] : vector<256x256xf32> to vector<256xf32>
    %38 = vector.shape_cast %37 : vector<256xf32> to vector<1x256xf32>
    %39 = tpu.reciprocal %38 {approx = true} : vector<1x256xf32> -> vector<1x256xf32>
    %40 = vector.broadcast %39 : vector<1x256xf32> to vector<256x256xf32>
    %41 = arith.mulf %36, %40 : vector<256x256xf32>
    %c0_24 = arith.constant 0 : index
    %c0_25 = arith.constant 0 : index
    %42 = vector.load %arg8[%c0_24, %c0_25] : memref<256x256xf32, #tpu.memory_space<vmem>>, vector<256x256xf32>
    tpu.vector_store %arg8[%c0_24, %c0_25], %41 {strides = array<i32>} : memref<256x256xf32, #tpu.memory_space<vmem>>, vector<256x256xf32>,
    return
  }
  func.func @transform_0(%arg0: i32) -> (i32, i32) {
    %c0_i32 = arith.constant 0 : i32
    %c0_i32_0 = arith.constant 0 : i32
    %c0_i32_1 = arith.constant 0 : i32
    return %c0_i32, %c0_i32_0 : i32, i32
  }
  func.func @transform_1(%arg0: i32) -> (i32, i32) {
    %c0_i32 = arith.constant 0 : i32
    %c0_i32_0 = arith.constant 0 : i32
    %c0_i32_1 = arith.constant 0 : i32
    return %c0_i32, %c0_i32_0 : i32, i32
  }
  func.func @transform_2(%arg0: i32) -> (i32, i32) {
    %c0_i32 = arith.constant 0 : i32
    %c0_i32_0 = arith.constant 0 : i32
    %c0_i32_1 = arith.constant 0 : i32
    return %c0_i32, %c0_i32_0 : i32, i32
  }
  func.func @transform_3(%arg0: i32) -> (i32, i32) {
    %c0_i32 = arith.constant 0 : i32
    %c0_i32_0 = arith.constant 0 : i32
    %c0_i32_1 = arith.constant 0 : i32
    return %c0_i32, %c0_i32_0 : i32, i32
  }
  func.func @transform_4(%arg0: i32) -> (i32, i32) {
    %c0_i32 = arith.constant 0 : i32
    %c0_i32_0 = arith.constant 0 : i32
    %c0_i32_1 = arith.constant 0 : i32
    return %c0_i32, %c0_i32_0 : i32, i32
  }
  func.func @transform_5(%arg0: i32) -> (i32, i32) {
    %c0_i32 = arith.constant 0 : i32
    %c0_i32_0 = arith.constant 0 : i32
    return %c0_i32, %arg0 : i32, i32
  }
  func.func @transform_6(%arg0: i32) -> (i32, i32) {
    %c0_i32 = arith.constant 0 : i32
    %c0_i32_0 = arith.constant 0 : i32
    return %c0_i32, %arg0 : i32, i32
  }
  func.func @transform_7(%arg0: i32) -> (i32, i32) {
    %c0_i32 = arith.constant 0 : i32
    %c0_i32_0 = arith.constant 0 : i32
    return %c0_i32, %arg0 : i32, i32
  }
}

</mosaic_0001>

<llo_original>
// kernel: tpu_custom_call.1
$region0: #{tpu_custom_call.1}
  #allocation0 [shape = 'u32[]', space=smem, size = 0x4, offset = 0x4, fixed_abs, tag = 'smem constant byte address 0x4 - core index']
  #allocation1 [shape = 'u32[144,128]{1,0:T(1,128)}', space=vmem, size = 0x12000, scoped, tag = 'internal scratch']
  #allocation2 [shape = 'f32[272,32]{1,0:T(8,128)}', space=vmem, size = 0x22000, scoped, tag = 'scratch operand']
  %s0 = inlined_call_operand.hbm [shape: bf16[256,256], index: 0, kind: input, shape index: {}]
  %s1 = inlined_call_operand.vmem [shape: bf16[256,32], index: 1, kind: input, shape index: {}]
  %s2 = inlined_call_operand.vmem [shape: f32[1,32], index: 2, kind: input, shape index: {}]
  %s3 = inlined_call_operand.vmem [shape: bf16[32,256], index: 3, kind: input, shape index: {}]
  %s4 = inlined_call_operand.vmem [shape: f32[32,1], index: 4, kind: input, shape index: {}]
  %s5 = inlined_call_operand.hbm [shape: bf16[256,256], index: 5, kind: input, shape index: {}]
  %s6 = inlined_call_operand.hbm [shape: bf16[256,256], index: 6, kind: input, shape index: {}]
  %s7 = inlined_call_operand.hbm [shape: f32[256,256], index: 7, kind: output, shape index: {}]
  %s8 = sld [smem:[#allocation0]]
  $region50: #{tpu_custom_call.1} parent=0
    _
  %s10 = ssub.s32 1, %s8
  %s11 = scalar_select 0, %s10, %s8
  $region1: #{tpu_custom_call.1} parent=0
    #allocation3 [shape = 'u8[131072]{0}', space=vmem, size = 0x20000, scoped, tag = 'input window, operand 0, single buffered']
    #allocation4 [shape = 's32[1]{0}', space=sflag, size = 0x4, scoped, tag = 'scoped memory for tpu_custom_call.1']
    #allocation5 [shape = 's32[1]{0}', space=sflag, size = 0x4, scoped, tag = 'scoped memory for tpu_custom_call.1']
    #allocation6 [shape = 'u8[131072]{0}', space=vmem, size = 0x20000, scoped, tag = 'input window, operand 5, single buffered']
    #allocation7 [shape = 's32[1]{0}', space=sflag, size = 0x4, scoped, tag = 'scoped memory for tpu_custom_call.1']
    #allocation8 [shape = 'u8[131072]{0}', space=vmem, size = 0x20000, scoped, tag = 'input window, operand 6, single buffered']
    #allocation9 [shape = 'u8[262144]{0}', space=vmem, size = 0x40000, scoped, tag = 'output window, operand 0, single buffered']
    %12 = vsyncpa [#allocation4], 0
    %13 = vsyncpa [#allocation7], 0
    %14 = vsyncpa [#allocation5], 0
    // Predicated region
    $region2: #{tpu_custom_call.1} parent=1 // pred_check
      _
    $region3: #{tpu_custom_call.1} parent=1 // pred_check_branch
      %16 = sbr.rel (0) target = $region5
    $region4: #{tpu_custom_call.1} parent=1 // pred_region
      %s18 = ssub.s32 4096, 4096
      %19 = vsyncadd [#allocation4], %s18
      %s20 = sshll.u32 [#allocation3], 4
      %s21 = int_to_ptr.vmem [resolvable:$true] %s20
      %26 = dma.hbm_to_vmem [thread:$0]  %s0, 4096, %s21, [#allocation4], 128, 128, 8
    $region5: #{tpu_custom_call.1} parent=1 // pred_fallthru
      _
    // Predicated region
    $region6: #{tpu_custom_call.1} parent=1 // pred_check
      _
    $region7: #{tpu_custom_call.1} parent=1 // pred_check_branch
      %28 = sbr.rel (0) target = $region9
    $region8: #{tpu_custom_call.1} parent=1 // pred_region
      _
    $region9: #{tpu_custom_call.1} parent=1 // pred_fallthru
      _
    // Predicated region
    $region10: #{tpu_custom_call.1} parent=1 // pred_check
      _
    $region11: #{tpu_custom_call.1} parent=1 // pred_check_branch
      %30 = sbr.rel (0) target = $region13
    $region12: #{tpu_custom_call.1} parent=1 // pred_region
      _
    $region13: #{tpu_custom_call.1} parent=1 // pred_fallthru
      _
    // Predicated region
    $region14: #{tpu_custom_call.1} parent=1 // pred_check
      _
    $region15: #{tpu_custom_call.1} parent=1 // pred_check_branch
      %32 = sbr.rel (0) target = $region17
    $region16: #{tpu_custom_call.1} parent=1 // pred_region
      _
    $region17: #{tpu_custom_call.1} parent=1 // pred_fallthru
      _
    // Predicated region
    $region18: #{tpu_custom_call.1} parent=1 // pred_check
      _
    $region19: #{tpu_custom_call.1} parent=1 // pred_check_branch
      %34 = sbr.rel (0) target = $region21
    $region20: #{tpu_custom_call.1} parent=1 // pred_region
      _
    $region21: #{tpu_custom_call.1} parent=1 // pred_fallthru
      _
    // Predicated region
    $region22: #{tpu_custom_call.1} parent=1 // pred_check
      _
    $region23: #{tpu_custom_call.1} parent=1 // pred_check_branch
      %36 = sbr.rel (0) target = $region25
    $region24: #{tpu_custom_call.1} parent=1 // pred_region
      %s38 = ssub.s32 4096, 4096
      %39 = vsyncadd [#allocation7], %s38
      %s40 = sshll.u32 [#allocation6], 4
      %s41 = int_to_ptr.vmem [resolvable:$true] %s40
      %46 = dma.hbm_to_vmem [thread:$0]  %s5, 4096, %s41, [#allocation7], 128, 128, 8
    $region25: #{tpu_custom_call.1} parent=1 // pred_fallthru
      _
    // Predicated region
    $region26: #{tpu_custom_call.1} parent=1 // pred_check
      _
    $region27: #{tpu_custom_call.1} parent=1 // pred_check_branch
      %48 = sbr.rel (0) target = $region29
    $region28: #{tpu_custom_call.1} parent=1 // pred_region
      %s50 = ssub.s32 4096, 4096
      %51 = vsyncadd [#allocation7], %s50
      %s52 = sshll.u32 [#allocation8], 4
      %s53 = int_to_ptr.vmem [resolvable:$true] %s52
      %58 = dma.hbm_to_vmem [thread:$0]  %s6, 4096, %s53, [#allocation7], 128, 128, 8
    $region29: #{tpu_custom_call.1} parent=1 // pred_fallthru
      _
    // Predicated region
    $region30: #{tpu_custom_call.1} parent=1 // pred_check
      _
    $region31: #{tpu_custom_call.1} parent=1 // pred_check_branch
      %60 = sbr.rel (0) target = $region33
    $region32: #{tpu_custom_call.1} parent=1 // pred_region
      %61 = dma.done [#allocation4], 4096
    $region33: #{tpu_custom_call.1} parent=1 // pred_fallthru
      _
    // Predicated region
    $region34: #{tpu_custom_call.1} parent=1 // pred_check
      _
    $region35: #{tpu_custom_call.1} parent=1 // pred_check_branch
      %63 = sbr.rel (0) target = $region37
    $region36: #{tpu_custom_call.1} parent=1 // pred_region
      %64 = dma.done [#allocation7], 4096
    $region37: #{tpu_custom_call.1} parent=1 // pred_fallthru
      _
    // Predicated region
    $region38: #{tpu_custom_call.1} parent=1 // pred_check
      _
    $region39: #{tpu_custom_call.1} parent=1 // pred_check_branch
      %66 = sbr.rel (0) target = $region41
    $region40: #{tpu_custom_call.1} parent=1 // pred_region
      %67 = dma.done [#allocation7], 4096
    $region41: #{tpu_custom_call.1} parent=1 // pred_fallthru
      _
    %v69 = vld [vmem:[#allocation3] sm:$0xff]
    %v70 = vld [vmem:[#allocation3 + $0x8] sm:$0xff]
    %v71 = vld [vmem:[#allocation3 + $0x10] sm:$0xff]
    %v72 = vld [vmem:[#allocation3 + $0x18] sm:$0xff]
    %v73 = vld [vmem:[#allocation3 + $0x20] sm:$0xff]
    %v74 = vld [vmem:[#allocation3 + $0x28] sm:$0xff]
    %v75 = vld [vmem:[#allocation3 + $0x30] sm:$0xff]
    %v76 = vld [vmem:[#allocation3 + $0x38] sm:$0xff]
    %v77 = vld [vmem:[#allocation3 + $0x40] sm:$0xff]
    %v78 = vld [vmem:[#allocation3 + $0x48] sm:$0xff]
    %v79 = vld [vmem:[#allocation3 + $0x50] sm:$0xff]
    %v80 = vld [vmem:[#allocation3 + $0x58] sm:$0xff]
    %v81 = vld [vmem:[#allocation3 + $0x60] sm:$0xff]
    %v82 = vld [vmem:[#allocation3 + $0x68] sm:$0xff]
    %v83 = vld [vmem:[#allocation3 + $0x70] sm:$0xff]
    %v84 = vld [vmem:[#allocation3 + $0x78] sm:$0xff]
    %v85 = vld [vmem:[#allocation3 + $0x80] sm:$0xff]
    %v86 = vld [vmem:[#allocation3 + $0x88] sm:$0xff]
    %v87 = vld [vmem:[#allocation3 + $0x90] sm:$0xff]
    %v88 = vld [vmem:[#allocation3 + $0x98] sm:$0xff]
    %v89 = vld [vmem:[#allocation3 + $0xa0] sm:$0xff]
    %v90 = vld [vmem:[#allocation3 + $0xa8] sm:$0xff]
    %v91 = vld [vmem:[#allocation3 + $0xb0] sm:$0xff]
    %v92 = vld [vmem:[#allocation3 + $0xb8] sm:$0xff]
    %v93 = vld [vmem:[#allocation3 + $0xc0] sm:$0xff]
    %v94 = vld [vmem:[#allocation3 + $0xc8] sm:$0xff]
    %v95 = vld [vmem:[#allocation3 + $0xd0] sm:$0xff]
    %v96 = vld [vmem:[#allocation3 + $0xd8] sm:$0xff]
    %v97 = vld [vmem:[#allocation3 + $0xe0] sm:$0xff]
    %v98 = vld [vmem:[#allocation3 + $0xe8] sm:$0xff]
    %v99 = vld [vmem:[#allocation3 + $0xf0] sm:$0xff]
    %v100 = vld [vmem:[#allocation3 + $0xf8] sm:$0xff]
    %v101 = vld [vmem:[%s1] sm:$0xf]
    %v102 = vld [vmem:[%s1 + $0x4] sm:$0xf]
    %v103 = vld [vmem:[%s1 + $0x8] sm:$0xf]
    %v104 = vld [vmem:[%s1 + $0xc] sm:$0xf]
    %v105 = vld [vmem:[%s1 + $0x10] sm:$0xf]
    %v106 = vld [vmem:[%s1 + $0x14] sm:$0xf]
    %v107 = vld [vmem:[%s1 + $0x18] sm:$0xf]
    %v108 = vld [vmem:[%s1 + $0x1c] sm:$0xf]
    %v109 = vld [vmem:[%s1 + $0x20] sm:$0xf]
    %v110 = vld [vmem:[%s1 + $0x24] sm:$0xf]
    %v111 = vld [vmem:[%s1 + $0x28] sm:$0xf]
    %v112 = vld [vmem:[%s1 + $0x2c] sm:$0xf]
    %v113 = vld [vmem:[%s1 + $0x30] sm:$0xf]
    %v114 = vld [vmem:[%s1 + $0x34] sm:$0xf]
    %v115 = vld [vmem:[%s1 + $0x38] sm:$0xf]
    %v116 = vld [vmem:[%s1 + $0x3c] sm:$0xf]
    %v117 = vld [vmem:[%s1 + $0x40] sm:$0xf]
    %v118 = vld [vmem:[%s1 + $0x44] sm:$0xf]
    %v119 = vld [vmem:[%s1 + $0x48] sm:$0xf]
    %v120 = vld [vmem:[%s1 + $0x4c] sm:$0xf]
    %v121 = vld [vmem:[%s1 + $0x50] sm:$0xf]
    %v122 = vld [vmem:[%s1 + $0x54] sm:$0xf]
    %v123 = vld [vmem:[%s1 + $0x58] sm:$0xf]
    %v124 = vld [vmem:[%s1 + $0x5c] sm:$0xf]
    %v125 = vld [vmem:[%s1 + $0x60] sm:$0xf]
    %v126 = vld [vmem:[%s1 + $0x64] sm:$0xf]
    %v127 = vld [vmem:[%s1 + $0x68] sm:$0xf]
    %v128 = vld [vmem:[%s1 + $0x6c] sm:$0xf]
    %v129 = vld [vmem:[%s1 + $0x70] sm:$0xf]
    %v130 = vld [vmem:[%s1 + $0x74] sm:$0xf]
    %v131 = vld [vmem:[%s1 + $0x78] sm:$0xf]
    %v132 = vld [vmem:[%s1 + $0x7c] sm:$0xf]
    %v133 = vld [vmem:[%s2] sm:$0x1]
    %v135 = vlaneseq
    %v136 = vshrl.u32 %v135, 7
    %v137 = vsub.s32 0, %v136
    %v138 = vrot.slane %v133, %v137
    %v172 = vunpack.c.l.b16 %v69
    %v173 = vunpack.c.h.b16 %v69
    %v174 = vunpack.c.l.b16 %v70
    %v175 = vunpack.c.h.b16 %v70
    %v176 = vunpack.c.l.b16 %v71
    %v177 = vunpack.c.h.b16 %v71
    %v178 = vunpack.c.l.b16 %v72
    %v179 = vunpack.c.h.b16 %v72
    %v180 = vunpack.c.l.b16 %v73
    %v181 = vunpack.c.h.b16 %v73
    %v182 = vunpack.c.l.b16 %v74
    %v183 = vunpack.c.h.b16 %v74
    %v184 = vunpack.c.l.b16 %v75
    %v185 = vunpack.c.h.b16 %v75
    %v186 = vunpack.c.l.b16 %v76
    %v187 = vunpack.c.h.b16 %v76
    %v188 = vunpack.c.l.b16 %v77
    %v189 = vunpack.c.h.b16 %v77
    %v190 = vunpack.c.l.b16 %v78
    %v191 = vunpack.c.h.b16 %v78
    %v192 = vunpack.c.l.b16 %v79
    %v193 = vunpack.c.h.b16 %v79
    %v194 = vunpack.c.l.b16 %v80
    %v195 = vunpack.c.h.b16 %v80
    %v196 = vunpack.c.l.b16 %v81
    %v197 = vunpack.c.h.b16 %v81
    %v198 = vunpack.c.l.b16 %v82
    %v199 = vunpack.c.h.b16 %v82
    %v200 = vunpack.c.l.b16 %v83
    %v201 = vunpack.c.h.b16 %v83
    %v202 = vunpack.c.l.b16 %v84
    %v203 = vunpack.c.h.b16 %v84
    %v204 = vunpack.c.l.b16 %v85
    %v205 = vunpack.c.h.b16 %v85
    %v206 = vunpack.c.l.b16 %v86
    %v207 = vunpack.c.h.b16 %v86
    %v208 = vunpack.c.l.b16 %v87
    %v209 = vunpack.c.h.b16 %v87
    %v210 = vunpack.c.l.b16 %v88
    %v211 = vunpack.c.h.b16 %v88
    %v212 = vunpack.c.l.b16 %v89
    %v213 = vunpack.c.h.b16 %v89
    %v214 = vunpack.c.l.b16 %v90
    %v215 = vunpack.c.h.b16 %v90
    %v216 = vunpack.c.l.b16 %v91
    %v217 = vunpack.c.h.b16 %v91
    %v218 = vunpack.c.l.b16 %v92
    %v219 = vunpack.c.h.b16 %v92
    %v220 = vunpack.c.l.b16 %v93
    %v221 = vunpack.c.h.b16 %v93
    %v222 = vunpack.c.l.b16 %v94
    %v223 = vunpack.c.h.b16 %v94
    %v224 = vunpack.c.l.b16 %v95
    %v225 = vunpack.c.h.b16 %v95
    %v226 = vunpack.c.l.b16 %v96
    %v227 = vunpack.c.h.b16 %v96
    %v228 = vunpack.c.l.b16 %v97
    %v229 = vunpack.c.h.b16 %v97
    %v230 = vunpack.c.l.b16 %v98
    %v231 = vunpack.c.h.b16 %v98
    %v232 = vunpack.c.l.b16 %v99
    %v233 = vunpack.c.h.b16 %v99
    %v234 = vunpack.c.l.b16 %v100
    %v235 = vunpack.c.h.b16 %v100
    %v236 = vpack.c.b16 %v174, %v172
    %v237 = vpack.c.b16 %v175, %v173
    %v238 = vpack.c.b16 %v178, %v176
    %v239 = vpack.c.b16 %v179, %v177
    %v240 = vpack.c.b16 %v182, %v180
    %v241 = vpack.c.b16 %v183, %v181
    %v242 = vpack.c.b16 %v186, %v184
    %v243 = vpack.c.b16 %v187, %v185
    %v244 = vpack.c.b16 %v190, %v188
    %v245 = vpack.c.b16 %v191, %v189
    %v246 = vpack.c.b16 %v194, %v192
    %v247 = vpack.c.b16 %v195, %v193
    %v248 = vpack.c.b16 %v198, %v196
    %v249 = vpack.c.b16 %v199, %v197
    %v250 = vpack.c.b16 %v202, %v200
    %v251 = vpack.c.b16 %v203, %v201
    %v252 = vpack.c.b16 %v206, %v204
    %v253 = vpack.c.b16 %v207, %v205
    %v254 = vpack.c.b16 %v210, %v208
    %v255 = vpack.c.b16 %v211, %v209
    %v256 = vpack.c.b16 %v214, %v212
    %v257 = vpack.c.b16 %v215, %v213
    %v258 = vpack.c.b16 %v218, %v216
    %v259 = vpack.c.b16 %v219, %v217
    %v260 = vpack.c.b16 %v222, %v220
    %v261 = vpack.c.b16 %v223, %v221
    %v262 = vpack.c.b16 %v226, %v224
    %v263 = vpack.c.b16 %v227, %v225
    %v264 = vpack.c.b16 %v230, %v228
    %v265 = vpack.c.b16 %v231, %v229
    %v266 = vpack.c.b16 %v234, %v232
    %v267 = vpack.c.b16 %v235, %v233
    %v332 = vunpack.c.l.b16 %v101
    %v333 = vunpack.c.l.b16 %v102
    %v334 = vunpack.c.l.b16 %v103
    %v335 = vunpack.c.l.b16 %v104
    %v336 = vunpack.c.l.b16 %v105
    %v337 = vunpack.c.l.b16 %v106
    %v338 = vunpack.c.l.b16 %v107
    %v339 = vunpack.c.l.b16 %v108
    %v340 = vunpack.c.l.b16 %v109
    %v341 = vunpack.c.l.b16 %v110
    %v342 = vunpack.c.l.b16 %v111
    %v343 = vunpack.c.l.b16 %v112
    %v344 = vunpack.c.l.b16 %v113
    %v345 = vunpack.c.l.b16 %v114
    %v346 = vunpack.c.l.b16 %v115
    %v347 = vunpack.c.l.b16 %v116
    %v348 = vunpack.c.l.b16 %v117
    %v349 = vunpack.c.l.b16 %v118
    %v350 = vunpack.c.l.b16 %v119
    %v351 = vunpack.c.l.b16 %v120
    %v352 = vunpack.c.l.b16 %v121
    %v353 = vunpack.c.l.b16 %v122
    %v354 = vunpack.c.l.b16 %v123
    %v355 = vunpack.c.l.b16 %v124
    %v356 = vunpack.c.l.b16 %v125
    %v357 = vunpack.c.l.b16 %v126
    %v358 = vunpack.c.l.b16 %v127
    %v359 = vunpack.c.l.b16 %v128
    %v360 = vunpack.c.l.b16 %v129
    %v361 = vunpack.c.l.b16 %v130
    %v362 = vunpack.c.l.b16 %v131
    %v363 = vunpack.c.l.b16 %v132
    %v364 = vpack.c.b16 %v333, %v332
    %v365 = vpack.c.b16 %v335, %v334
    %v366 = vpack.c.b16 %v337, %v336
    %v367 = vpack.c.b16 %v339, %v338
    %v368 = vpack.c.b16 %v341, %v340
    %v369 = vpack.c.b16 %v343, %v342
    %v370 = vpack.c.b16 %v345, %v344
    %v371 = vpack.c.b16 %v347, %v346
    %v372 = vpack.c.b16 %v349, %v348
    %v373 = vpack.c.b16 %v351, %v350
    %v374 = vpack.c.b16 %v353, %v352
    %v375 = vpack.c.b16 %v355, %v354
    %v376 = vpack.c.b16 %v357, %v356
    %v377 = vpack.c.b16 %v359, %v358
    %v378 = vpack.c.b16 %v361, %v360
    %v379 = vpack.c.b16 %v363, %v362
    %396 = vmatprep.subr.bf16.mxu0 0
    %397 = vmatpush1.bf16.msra.mxu0 %v371
    %398 = vmatprep.subr.bf16.mxu0 0
    %399 = vmatpush1.bf16.msra.mxu0 %v370
    %400 = vmatprep.subr.bf16.mxu0 0
    %401 = vmatpush1.bf16.msra.mxu0 %v369
    %402 = vmatprep.subr.bf16.mxu0 0
    %403 = vmatpush1.bf16.msra.mxu0 %v368
    %404 = vmatprep.subr.bf16.mxu0 0
    %405 = vmatpush1.bf16.msra.mxu0 %v367
    %406 = vmatprep.subr.bf16.mxu0 0
    %407 = vmatpush1.bf16.msra.mxu0 %v366
    %408 = vmatprep.subr.bf16.mxu0 0
    %409 = vmatpush1.bf16.msra.mxu0 %v365
    %410 = vmatprep.subr.bf16.mxu0 0
    %411 = vmatpush1.bf16.msra.mxu0 %v364
    %412 = vmatprep.subr.bf16.mxu0 0
    %413 = vmatpush2.bf16.msra.mxu0 %v379
    %414 = vmatprep.subr.bf16.mxu0 0
    %415 = vmatpush2.bf16.msra.mxu0 %v378
    %416 = vmatprep.subr.bf16.mxu0 0
    %417 = vmatpush2.bf16.msra.mxu0 %v377
    %418 = vmatprep.subr.bf16.mxu0 0
    %419 = vmatpush2.bf16.msra.mxu0 %v376
    %420 = vmatprep.subr.bf16.mxu0 0
    %421 = vmatpush2.bf16.msra.mxu0 %v375
    %422 = vmatprep.subr.bf16.mxu0 0
    %423 = vmatpush2.bf16.msra.mxu0 %v374
    %424 = vmatprep.subr.bf16.mxu0 0
    %425 = vmatpush2.bf16.msra.mxu0 %v373
    %426 = vmatprep.subr.bf16.mxu0 0
    %427 = vmatpush2.bf16.msra.mxu0 %v372
    %428 = vmatprep.mubr.bf16.mxu0 %v237
    %429 = vmatmul.mubr.bf16.gmra.mxu0 %v236
    %v430 = vpop.f32.mrf.mxu0
    %v431 = vadd.f32 %v138, %v430
    %v432 = vpop.f32.mrf.mxu0
    %v433 = vpop.f32.mrf.mxu0
    %v434 = vadd.f32 %v138, %v433
    %v435 = vpop.f32.mrf.mxu0
    %436 = vmatprep.mubr.bf16.mxu0 %v239
    %437 = vmatmul.mubr.bf16.gmra.mxu0 %v238
    %v438 = vpop.f32.mrf.mxu0
    %v439 = vadd.f32 %v138, %v438
    %v440 = vpop.f32.mrf.mxu0
    %v441 = vpop.f32.mrf.mxu0
    %v442 = vadd.f32 %v138, %v441
    %v443 = vpop.f32.mrf.mxu0
    %444 = vmatprep.mubr.bf16.mxu0 %v241
    %445 = vmatmul.mubr.bf16.gmra.mxu0 %v240
    %v446 = vpop.f32.mrf.mxu0
    %v447 = vadd.f32 %v138, %v446
    %v448 = vpop.f32.mrf.mxu0
    %v449 = vpop.f32.mrf.mxu0
    %v450 = vadd.f32 %v138, %v449
    %v451 = vpop.f32.mrf.mxu0
    %452 = vmatprep.mubr.bf16.mxu0 %v243
    %453 = vmatmul.mubr.bf16.gmra.mxu0 %v242
    %v454 = vpop.f32.mrf.mxu0
    %v455 = vadd.f32 %v138, %v454
    %v456 = vpop.f32.mrf.mxu0
    %v457 = vpop.f32.mrf.mxu0
    %v458 = vadd.f32 %v138, %v457
    %v459 = vpop.f32.mrf.mxu0
    %460 = vmatprep.mubr.bf16.mxu0 %v245
    %461 = vmatmul.mubr.bf16.gmra.mxu0 %v244
    %v462 = vpop.f32.mrf.mxu0
    %v463 = vadd.f32 %v138, %v462
    %v464 = vpop.f32.mrf.mxu0
    %v465 = vpop.f32.mrf.mxu0
    %v466 = vadd.f32 %v138, %v465
    %v467 = vpop.f32.mrf.mxu0
    %468 = vmatprep.mubr.bf16.mxu0 %v247
    %469 = vmatmul.mubr.bf16.gmra.mxu0 %v246
    %v470 = vpop.f32.mrf.mxu0
    %v471 = vadd.f32 %v138, %v470
    %v472 = vpop.f32.mrf.mxu0
    %v473 = vpop.f32.mrf.mxu0
    %v474 = vadd.f32 %v138, %v473
    %v475 = vpop.f32.mrf.mxu0
    %476 = vmatprep.mubr.bf16.mxu0 %v249
    %477 = vmatmul.mubr.bf16.gmra.mxu0 %v248
    %v478 = vpop.f32.mrf.mxu0
    %v479 = vadd.f32 %v138, %v478
    %v480 = vpop.f32.mrf.mxu0
    %v481 = vpop.f32.mrf.mxu0
    %v482 = vadd.f32 %v138, %v481
    %v483 = vpop.f32.mrf.mxu0
    %484 = vmatprep.mubr.bf16.mxu0 %v251
    %485 = vmatmul.mubr.bf16.gmra.mxu0 %v250
    %v486 = vpop.f32.mrf.mxu0
    %v487 = vadd.f32 %v138, %v486
    %v488 = vpop.f32.mrf.mxu0
    %v489 = vpop.f32.mrf.mxu0
    %v490 = vadd.f32 %v138, %v489
    %v491 = vpop.f32.mrf.mxu0
    %492 = vmatprep.mubr.bf16.mxu0 %v253
    %493 = vmatmul.mubr.bf16.gmra.mxu0 %v252
    %v494 = vpop.f32.mrf.mxu0
    %v495 = vadd.f32 %v138, %v494
    %v496 = vpop.f32.mrf.mxu0
    %v497 = vpop.f32.mrf.mxu0
    %v498 = vadd.f32 %v138, %v497
    %v499 = vpop.f32.mrf.mxu0
    %500 = vmatprep.mubr.bf16.mxu0 %v255
    %501 = vmatmul.mubr.bf16.gmra.mxu0 %v254
    %v502 = vpop.f32.mrf.mxu0
    %v503 = vadd.f32 %v138, %v502
    %v504 = vpop.f32.mrf.mxu0
    %v505 = vpop.f32.mrf.mxu0
    %v506 = vadd.f32 %v138, %v505
    %v507 = vpop.f32.mrf.mxu0
    %508 = vmatprep.mubr.bf16.mxu0 %v257
    %509 = vmatmul.mubr.bf16.gmra.mxu0 %v256
    %v510 = vpop.f32.mrf.mxu0
    %v511 = vadd.f32 %v138, %v510
    %v512 = vpop.f32.mrf.mxu0
    %v513 = vpop.f32.mrf.mxu0
    %v514 = vadd.f32 %v138, %v513
    %v515 = vpop.f32.mrf.mxu0
    %516 = vmatprep.mubr.bf16.mxu0 %v259
    %517 = vmatmul.mubr.bf16.gmra.mxu0 %v258
    %v518 = vpop.f32.mrf.mxu0
    %v519 = vadd.f32 %v138, %v518
    %v520 = vpop.f32.mrf.mxu0
    %v521 = vpop.f32.mrf.mxu0
    %v522 = vadd.f32 %v138, %v521
    %v523 = vpop.f32.mrf.mxu0
    %524 = vmatprep.mubr.bf16.mxu0 %v261
    %525 = vmatmul.mubr.bf16.gmra.mxu0 %v260
    %v526 = vpop.f32.mrf.mxu0
    %v527 = vadd.f32 %v138, %v526
    %v528 = vpop.f32.mrf.mxu0
    %v529 = vpop.f32.mrf.mxu0
    %v530 = vadd.f32 %v138, %v529
    %v531 = vpop.f32.mrf.mxu0
    %532 = vmatprep.mubr.bf16.mxu0 %v263
    %533 = vmatmul.mubr.bf16.gmra.mxu0 %v262
    %v534 = vpop.f32.mrf.mxu0
    %v535 = vadd.f32 %v138, %v534
    %v536 = vpop.f32.mrf.mxu0
    %v537 = vpop.f32.mrf.mxu0
    %v538 = vadd.f32 %v138, %v537
    %v539 = vpop.f32.mrf.mxu0
    %540 = vmatprep.mubr.bf16.mxu0 %v265
    %541 = vmatmul.mubr.bf16.gmra.mxu0 %v264
    %v542 = vpop.f32.mrf.mxu0
    %v543 = vadd.f32 %v138, %v542
    %v544 = vpop.f32.mrf.mxu0
    %v545 = vpop.f32.mrf.mxu0
    %v546 = vadd.f32 %v138, %v545
    %v547 = vpop.f32.mrf.mxu0
    %548 = vmatprep.mubr.bf16.mxu0 %v267
    %549 = vmatmul.mubr.bf16.gmra.mxu0 %v266
    %v550 = vpop.f32.mrf.mxu0
    %v551 = vadd.f32 %v138, %v550
    %v552 = vpop.f32.mrf.mxu0
    %v553 = vpop.f32.mrf.mxu0
    %v554 = vadd.f32 %v138, %v553
    %v555 = vpop.f32.mrf.mxu0
    %556 = vdwg.mxu0
    %vm557 = vcmask 261120
    %558 = vst.msk [vmem:[#allocation2] sm:$0xff] %vm557, 0.0
    %559 = vst.msk [vmem:[#allocation2 + $0x108] sm:$0xff] %vm557, 0.0
    %560 = vst.msk [vmem:[#allocation2 + $0x8] sm:$0xff] %vm557, %v431
    %561 = vst.msk [vmem:[#allocation2 + $0x10] sm:$0xff] %vm557, %v434
    %562 = vst.msk [vmem:[#allocation2 + $0x18] sm:$0xff] %vm557, %v439
    %563 = vst.msk [vmem:[#allocation2 + $0x20] sm:$0xff] %vm557, %v442
    %564 = vst.msk [vmem:[#allocation2 + $0x28] sm:$0xff] %vm557, %v447
    %565 = vst.msk [vmem:[#allocation2 + $0x30] sm:$0xff] %vm557, %v450
    %566 = vst.msk [vmem:[#allocation2 + $0x38] sm:$0xff] %vm557, %v455
    %567 = vst.msk [vmem:[#allocation2 + $0x40] sm:$0xff] %vm557, %v458
    %568 = vst.msk [vmem:[#allocation2 + $0x48] sm:$0xff] %vm557, %v463
    %569 = vst.msk [vmem:[#allocation2 + $0x50] sm:$0xff] %vm557, %v466
    %570 = vst.msk [vmem:[#allocation2 + $0x58] sm:$0xff] %vm557, %v471
    %571 = vst.msk [vmem:[#allocation2 + $0x60] sm:$0xff] %vm557, %v474
    %572 = vst.msk [vmem:[#allocation2 + $0x68] sm:$0xff] %vm557, %v479
    %573 = vst.msk [vmem:[#allocation2 + $0x70] sm:$0xff] %vm557, %v482
    %574 = vst.msk [vmem:[#allocation2 + $0x78] sm:$0xff] %vm557, %v487
    %575 = vst.msk [vmem:[#allocation2 + $0x80] sm:$0xff] %vm557, %v490
    %576 = vst.msk [vmem:[#allocation2 + $0x88] sm:$0xff] %vm557, %v495
    %577 = vst.msk [vmem:[#allocation2 + $0x90] sm:$0xff] %vm557, %v498
    %578 = vst.msk [vmem:[#allocation2 + $0x98] sm:$0xff] %vm557, %v503
    %579 = vst.msk [vmem:[#allocation2 + $0xa0] sm:$0xff] %vm557, %v506
    %580 = vst.msk [vmem:[#allocation2 + $0xa8] sm:$0xff] %vm557, %v511
    %581 = vst.msk [vmem:[#allocation2 + $0xb0] sm:$0xff] %vm557, %v514
    %582 = vst.msk [vmem:[#allocation2 + $0xb8] sm:$0xff] %vm557, %v519
    %583 = vst.msk [vmem:[#allocation2 + $0xc0] sm:$0xff] %vm557, %v522
    %584 = vst.msk [vmem:[#allocation2 + $0xc8] sm:$0xff] %vm557, %v527
    %585 = vst.msk [vmem:[#allocation2 + $0xd0] sm:$0xff] %vm557, %v530
    %586 = vst.msk [vmem:[#allocation2 + $0xd8] sm:$0xff] %vm557, %v535
    %587 = vst.msk [vmem:[#allocation2 + $0xe0] sm:$0xff] %vm557, %v538
    %588 = vst.msk [vmem:[#allocation2 + $0xe8] sm:$0xff] %vm557, %v543
    %589 = vst.msk [vmem:[#allocation2 + $0xf0] sm:$0xff] %vm557, %v546
    %590 = vst.msk [vmem:[#allocation2 + $0xf8] sm:$0xff] %vm557, %v551
    %591 = vst.msk [vmem:[#allocation2 + $0x100] sm:$0xff] %vm557, %v554
    %v592 = vld [vmem:[#allocation2] sm:$0xff]
    %v593 = vld [vmem:[#allocation2 + $0x8] sm:$0xff]
    %v594 = vld [vmem:[#allocation2 + $0x10] sm:$0xff]
    %v595 = vld [vmem:[#allocation2 + $0x18] sm:$0xff]
    %v596 = vld [vmem:[#allocation2 + $0x20] sm:$0xff]
    %v597 = vld [vmem:[#allocation2 + $0x28] sm:$0xff]
    %v598 = vld [vmem:[#allocation2 + $0x30] sm:$0xff]
    %v599 = vld [vmem:[#allocation2 + $0x38] sm:$0xff]
    %v600 = vld [vmem:[#allocation2 + $0x40] sm:$0xff]
    %v601 = vld [vmem:[#allocation2 + $0x48] sm:$0xff]
    %v602 = vld [vmem:[#allocation2 + $0x50] sm:$0xff]
    %v603 = vld [vmem:[#allocation2 + $0x58] sm:$0xff]
    %v604 = vld [vmem:[#allocation2 + $0x60] sm:$0xff]
    %v605 = vld [vmem:[#allocation2 + $0x68] sm:$0xff]
    %v606 = vld [vmem:[#allocation2 + $0x70] sm:$0xff]
    %v607 = vld [vmem:[#allocation2 + $0x78] sm:$0xff]
    %v608 = vld [vmem:[#allocation2 + $0x80] sm:$0xff]
    %v609 = vld [vmem:[#allocation2 + $0x88] sm:$0xff]
    %v610 = vld [vmem:[#allocation2 + $0x90] sm:$0xff]
    %v611 = vld [vmem:[#allocation2 + $0x98] sm:$0xff]
    %v612 = vld [vmem:[#allocation2 + $0xa0] sm:$0xff]
    %v613 = vld [vmem:[#allocation2 + $0xa8] sm:$0xff]
    %v614 = vld [vmem:[#allocation2 + $0xb0] sm:$0xff]
    %v615 = vld [vmem:[#allocation2 + $0xb8] sm:$0xff]
    %v616 = vld [vmem:[#allocation2 + $0xc0] sm:$0xff]
    %v617 = vld [vmem:[#allocation2 + $0xc8] sm:$0xff]
    %v618 = vld [vmem:[#allocation2 + $0xd0] sm:$0xff]
    %v619 = vld [vmem:[#allocation2 + $0xd8] sm:$0xff]
    %v620 = vld [vmem:[#allocation2 + $0xe0] sm:$0xff]
    %v621 = vld [vmem:[#allocation2 + $0xe8] sm:$0xff]
    %v622 = vld [vmem:[#allocation2 + $0xf0] sm:$0xff]
    %v623 = vld [vmem:[#allocation2 + $0xf8] sm:$0xff]
    %v624 = vld [vmem:[#allocation2 + $0x100] sm:$0xff]
    %v625 = vld [vmem:[#allocation2 + $0x108] sm:$0xff]
    %v626 = vrot.slane %v593, 2
    %v627 = vrot.slane %v594, 2
    %v628 = vrot.slane %v595, 2
    %v629 = vrot.slane %v596, 2
    %v630 = vrot.slane %v597, 2
    %v631 = vrot.slane %v598, 2
    %v632 = vrot.slane %v599, 2
    %v633 = vrot.slane %v600, 2
    %v634 = vrot.slane %v601, 2
    %v635 = vrot.slane %v602, 2
    %v636 = vrot.slane %v603, 2
    %v637 = vrot.slane %v604, 2
    %v638 = vrot.slane %v605, 2
    %v639 = vrot.slane %v606, 2
    %v640 = vrot.slane %v607, 2
    %v641 = vrot.slane %v608, 2
    %v642 = vrot.slane %v609, 2
    %v643 = vrot.slane %v610, 2
    %v644 = vrot.slane %v611, 2
    %v645 = vrot.slane %v612, 2
    %v646 = vrot.slane %v613, 2
    %v647 = vrot.slane %v614, 2
    %v648 = vrot.slane %v615, 2
    %v649 = vrot.slane %v616, 2
    %v650 = vrot.slane %v617, 2
    %v651 = vrot.slane %v618, 2
    %v652 = vrot.slane %v619, 2
    %v653 = vrot.slane %v620, 2
    %v654 = vrot.slane %v621, 2
    %v655 = vrot.slane %v622, 2
    %v656 = vrot.slane %v623, 2
    %v657 = vrot.slane %v624, 2
    %v658 = vrot.slane %v625, 2
    %v659 = vlaneseq
    %v660 = vshrl.u32 %v659, 7
    %vm661 = vcmp.lt.s32.totalorder %v660, 6
    %v662 = vsel %vm661, %v657, %v658
    %v663 = vsel %vm661, %v656, %v657
    %v664 = vsel %vm661, %v655, %v656
    %v665 = vsel %vm661, %v654, %v655
    %v666 = vsel %vm661, %v653, %v654
    %v667 = vsel %vm661, %v652, %v653
    %v668 = vsel %vm661, %v651, %v652
    %v669 = vsel %vm661, %v650, %v651
    %v670 = vsel %vm661, %v649, %v650
    %v671 = vsel %vm661, %v648, %v649
    %v672 = vsel %vm661, %v647, %v648
    %v673 = vsel %vm661, %v646, %v647
    %v674 = vsel %vm661, %v645, %v646
    %v675 = vsel %vm661, %v644, %v645
    %v676 = vsel %vm661, %v643, %v644
    %v677 = vsel %vm661, %v642, %v643
    %v678 = vsel %vm661, %v641, %v642
    %v679 = vsel %vm661, %v640, %v641
    %v680 = vsel %vm661, %v639, %v640
    %v681 = vsel %vm661, %v638, %v639
    %v682 = vsel %vm661, %v637, %v638
    %v683 = vsel %vm661, %v636, %v637
    %v684 = vsel %vm661, %v635, %v636
    %v685 = vsel %vm661, %v634, %v635
    %v686 = vsel %vm661, %v633, %v634
    %v687 = vsel %vm661, %v632, %v633
    %v688 = vsel %vm661, %v631, %v632
    %v689 = vsel %vm661, %v630, %v631
    %v690 = vsel %vm661, %v629, %v630
    %v691 = vsel %vm661, %v628, %v629
    %v692 = vsel %vm661, %v627, %v628
    %v693 = vsel %vm661, %v626, %v627
    %v694 = vadd.f32 %v593, %v693
    %v695 = vadd.f32 %v594, %v692
    %v696 = vadd.f32 %v595, %v691
    %v697 = vadd.f32 %v596, %v690
    %v698 = vadd.f32 %v597, %v689
    %v699 = vadd.f32 %v598, %v688
    %v700 = vadd.f32 %v599, %v687
    %v701 = vadd.f32 %v600, %v686
    %v702 = vadd.f32 %v601, %v685
    %v703 = vadd.f32 %v602, %v684
    %v704 = vadd.f32 %v603, %v683
    %v705 = vadd.f32 %v604, %v682
    %v706 = vadd.f32 %v605, %v681
    %v707 = vadd.f32 %v606, %v680
    %v708 = vadd.f32 %v607, %v679
    %v709 = vadd.f32 %v608, %v678
    %v710 = vadd.f32 %v609, %v677
    %v711 = vadd.f32 %v610, %v676
    %v712 = vadd.f32 %v611, %v675
    %v713 = vadd.f32 %v612, %v674
    %v714 = vadd.f32 %v613, %v673
    %v715 = vadd.f32 %v614, %v672
    %v716 = vadd.f32 %v615, %v671
    %v717 = vadd.f32 %v616, %v670
    %v718 = vadd.f32 %v617, %v669
    %v719 = vadd.f32 %v618, %v668
    %v720 = vadd.f32 %v619, %v667
    %v721 = vadd.f32 %v620, %v666
    %v722 = vadd.f32 %v621, %v665
    %v723 = vadd.f32 %v622, %v664
    %v724 = vadd.f32 %v623, %v663
    %v725 = vadd.f32 %v624, %v662
    %v726 = vrot.slane %v593, 1
    %v727 = vrot.slane %v594, 1
    %v728 = vrot.slane %v595, 1
    %v729 = vrot.slane %v596, 1
    %v730 = vrot.slane %v597, 1
    %v731 = vrot.slane %v598, 1
    %v732 = vrot.slane %v599, 1
    %v733 = vrot.slane %v600, 1
    %v734 = vrot.slane %v601, 1
    %v735 = vrot.slane %v602, 1
    %v736 = vrot.slane %v603, 1
    %v737 = vrot.slane %v604, 1
    %v738 = vrot.slane %v605, 1
    %v739 = vrot.slane %v606, 1
    %v740 = vrot.slane %v607, 1
    %v741 = vrot.slane %v608, 1
    %v742 = vrot.slane %v609, 1
    %v743 = vrot.slane %v610, 1
    %v744 = vrot.slane %v611, 1
    %v745 = vrot.slane %v612, 1
    %v746 = vrot.slane %v613, 1
    %v747 = vrot.slane %v614, 1
    %v748 = vrot.slane %v615, 1
    %v749 = vrot.slane %v616, 1
    %v750 = vrot.slane %v617, 1
    %v751 = vrot.slane %v618, 1
    %v752 = vrot.slane %v619, 1
    %v753 = vrot.slane %v620, 1
    %v754 = vrot.slane %v621, 1
    %v755 = vrot.slane %v622, 1
    %v756 = vrot.slane %v623, 1
    %v757 = vrot.slane %v624, 1
    %v758 = vrot.slane %v625, 1
    %vm759 = vcmp.lt.s32.totalorder %v660, 7
    %v760 = vsel %vm759, %v757, %v758
    %v761 = vsel %vm759, %v756, %v757
    %v762 = vsel %vm759, %v755, %v756
    %v763 = vsel %vm759, %v754, %v755
    %v764 = vsel %vm759, %v753, %v754
    %v765 = vsel %vm759, %v752, %v753
    %v766 = vsel %vm759, %v751, %v752
    %v767 = vsel %vm759, %v750, %v751
    %v768 = vsel %vm759, %v749, %v750
    %v769 = vsel %vm759, %v748, %v749
    %v770 = vsel %vm759, %v747, %v748
    %v771 = vsel %vm759, %v746, %v747
    %v772 = vsel %vm759, %v745, %v746
    %v773 = vsel %vm759, %v744, %v745
    %v774 = vsel %vm759, %v743, %v744
    %v775 = vsel %vm759, %v742, %v743
    %v776 = vsel %vm759, %v741, %v742
    %v777 = vsel %vm759, %v740, %v741
    %v778 = vsel %vm759, %v739, %v740
    %v779 = vsel %vm759, %v738, %v739
    %v780 = vsel %vm759, %v737, %v738
    %v781 = vsel %vm759, %v736, %v737
    %v782 = vsel %vm759, %v735, %v736
    %v783 = vsel %vm759, %v734, %v735
    %v784 = vsel %vm759, %v733, %v734
    %v785 = vsel %vm759, %v732, %v733
    %v786 = vsel %vm759, %v731, %v732
    %v787 = vsel %vm759, %v730, %v731
    %v788 = vsel %vm759, %v729, %v730
    %v789 = vsel %vm759, %v728, %v729
    %v790 = vsel %vm759, %v727, %v728
    %v791 = vsel %vm759, %v726, %v727
    %v792 = vadd.f32 %v694, %v791
    %v793 = vadd.f32 %v695, %v790
    %v794 = vadd.f32 %v696, %v789
    %v795 = vadd.f32 %v697, %v788
    %v796 = vadd.f32 %v698, %v787
    %v797 = vadd.f32 %v699, %v786
    %v798 = vadd.f32 %v700, %v785
    %v799 = vadd.f32 %v701, %v784
    %v800 = vadd.f32 %v702, %v783
    %v801 = vadd.f32 %v703, %v782
    %v802 = vadd.f32 %v704, %v781
    %v803 = vadd.f32 %v705, %v780
    %v804 = vadd.f32 %v706, %v779
    %v805 = vadd.f32 %v707, %v778
    %v806 = vadd.f32 %v708, %v777
    %v807 = vadd.f32 %v709, %v776
    %v808 = vadd.f32 %v710, %v775
    %v809 = vadd.f32 %v711, %v774
    %v810 = vadd.f32 %v712, %v773
    %v811 = vadd.f32 %v713, %v772
    %v812 = vadd.f32 %v714, %v771
    %v813 = vadd.f32 %v715, %v770
    %v814 = vadd.f32 %v716, %v769
    %v815 = vadd.f32 %v717, %v768
    %v816 = vadd.f32 %v718, %v767
    %v817 = vadd.f32 %v719, %v766
    %v818 = vadd.f32 %v720, %v765
    %v819 = vadd.f32 %v721, %v764
    %v820 = vadd.f32 %v722, %v763
    %v821 = vadd.f32 %v723, %v762
    %v822 = vadd.f32 %v724, %v761
    %v823 = vadd.f32 %v725, %v760
    %v824 = vrot.slane %v592, 7
    %v825 = vrot.slane %v593, 7
    %v826 = vrot.slane %v594, 7
    %v827 = vrot.slane %v595, 7
    %v828 = vrot.slane %v596, 7
    %v829 = vrot.slane %v597, 7
    %v830 = vrot.slane %v598, 7
    %v831 = vrot.slane %v599, 7
    %v832 = vrot.slane %v600, 7
    %v833 = vrot.slane %v601, 7
    %v834 = vrot.slane %v602, 7
    %v835 = vrot.slane %v603, 7
    %v836 = vrot.slane %v604, 7
    %v837 = vrot.slane %v605, 7
    %v838 = vrot.slane %v606, 7
    %v839 = vrot.slane %v607, 7
    %v840 = vrot.slane %v608, 7
    %v841 = vrot.slane %v609, 7
    %v842 = vrot.slane %v610, 7
    %v843 = vrot.slane %v611, 7
    %v844 = vrot.slane %v612, 7
    %v845 = vrot.slane %v613, 7
    %v846 = vrot.slane %v614, 7
    %v847 = vrot.slane %v615, 7
    %v848 = vrot.slane %v616, 7
    %v849 = vrot.slane %v617, 7
    %v850 = vrot.slane %v618, 7
    %v851 = vrot.slane %v619, 7
    %v852 = vrot.slane %v620, 7
    %v853 = vrot.slane %v621, 7
    %v854 = vrot.slane %v622, 7
    %v855 = vrot.slane %v623, 7
    %v856 = vrot.slane %v624, 7
    %vm857 = vcmp.lt.s32.totalorder %v660, 1
    %v858 = vsel %vm857, %v855, %v856
    %v859 = vsel %vm857, %v854, %v855
    %v860 = vsel %vm857, %v853, %v854
    %v861 = vsel %vm857, %v852, %v853
    %v862 = vsel %vm857, %v851, %v852
    %v863 = vsel %vm857, %v850, %v851
    %v864 = vsel %vm857, %v849, %v850
    %v865 = vsel %vm857, %v848, %v849
    %v866 = vsel %vm857, %v847, %v848
    %v867 = vsel %vm857, %v846, %v847
    %v868 = vsel %vm857, %v845, %v846
    %v869 = vsel %vm857, %v844, %v845
    %v870 = vsel %vm857, %v843, %v844
    %v871 = vsel %vm857, %v842, %v843
    %v872 = vsel %vm857, %v841, %v842
    %v873 = vsel %vm857, %v840, %v841
    %v874 = vsel %vm857, %v839, %v840
    %v875 = vsel %vm857, %v838, %v839
    %v876 = vsel %vm857, %v837, %v838
    %v877 = vsel %vm857, %v836, %v837
    %v878 = vsel %vm857, %v835, %v836
    %v879 = vsel %vm857, %v834, %v835
    %v880 = vsel %vm857, %v833, %v834
    %v881 = vsel %vm857, %v832, %v833
    %v882 = vsel %vm857, %v831, %v832
    %v883 = vsel %vm857, %v830, %v831
    %v884 = vsel %vm857, %v829, %v830
    %v885 = vsel %vm857, %v828, %v829
    %v886 = vsel %vm857, %v827, %v828
    %v887 = vsel %vm857, %v826, %v827
    %v888 = vsel %vm857, %v825, %v826
    %v889 = vsel %vm857, %v824, %v825
    %v890 = vadd.f32 %v792, %v889
    %v891 = vadd.f32 %v793, %v888
    %v892 = vadd.f32 %v794, %v887
    %v893 = vadd.f32 %v795, %v886
    %v894 = vadd.f32 %v796, %v885
    %v895 = vadd.f32 %v797, %v884
    %v896 = vadd.f32 %v798, %v883
    %v897 = vadd.f32 %v799, %v882
    %v898 = vadd.f32 %v800, %v881
    %v899 = vadd.f32 %v801, %v880
    %v900 = vadd.f32 %v802, %v879
    %v901 = vadd.f32 %v803, %v878
    %v902 = vadd.f32 %v804, %v877
    %v903 = vadd.f32 %v805, %v876
    %v904 = vadd.f32 %v806, %v875
    %v905 = vadd.f32 %v807, %v874
    %v906 = vadd.f32 %v808, %v873
    %v907 = vadd.f32 %v809, %v872
    %v908 = vadd.f32 %v810, %v871
    %v909 = vadd.f32 %v811, %v870
    %v910 = vadd.f32 %v812, %v869
    %v911 = vadd.f32 %v813, %v868
    %v912 = vadd.f32 %v814, %v867
    %v913 = vadd.f32 %v815, %v866
    %v914 = vadd.f32 %v816, %v865
    %v915 = vadd.f32 %v817, %v864
    %v916 = vadd.f32 %v818, %v863
    %v917 = vadd.f32 %v819, %v862
    %v918 = vadd.f32 %v820, %v861
    %v919 = vadd.f32 %v821, %v860
    %v920 = vadd.f32 %v822, %v859
    %v921 = vadd.f32 %v823, %v858
    %v922 = vrot.slane %v592, 6
    %v923 = vrot.slane %v593, 6
    %v924 = vrot.slane %v594, 6
    %v925 = vrot.slane %v595, 6
    %v926 = vrot.slane %v596, 6
    %v927 = vrot.slane %v597, 6
    %v928 = vrot.slane %v598, 6
    %v929 = vrot.slane %v599, 6
    %v930 = vrot.slane %v600, 6
    %v931 = vrot.slane %v601, 6
    %v932 = vrot.slane %v602, 6
    %v933 = vrot.slane %v603, 6
    %v934 = vrot.slane %v604, 6
    %v935 = vrot.slane %v605, 6
    %v936 = vrot.slane %v606, 6
    %v937 = vrot.slane %v607, 6
    %v938 = vrot.slane %v608, 6
    %v939 = vrot.slane %v609, 6
    %v940 = vrot.slane %v610, 6
    %v941 = vrot.slane %v611, 6
    %v942 = vrot.slane %v612, 6
    %v943 = vrot.slane %v613, 6
    %v944 = vrot.slane %v614, 6
    %v945 = vrot.slane %v615, 6
    %v946 = vrot.slane %v616, 6
    %v947 = vrot.slane %v617, 6
    %v948 = vrot.slane %v618, 6
    %v949 = vrot.slane %v619, 6
    %v950 = vrot.slane %v620, 6
    %v951 = vrot.slane %v621, 6
    %v952 = vrot.slane %v622, 6
    %v953 = vrot.slane %v623, 6
    %v954 = vrot.slane %v624, 6
    %vm955 = vcmp.lt.s32.totalorder %v660, 2
    %v956 = vsel %vm955, %v953, %v954
    %v957 = vsel %vm955, %v952, %v953
    %v958 = vsel %vm955, %v951, %v952
    %v959 = vsel %vm955, %v950, %v951
    %v960 = vsel %vm955, %v949, %v950
    %v961 = vsel %vm955, %v948, %v949
    %v962 = vsel %vm955, %v947, %v948
    %v963 = vsel %vm955, %v946, %v947
    %v964 = vsel %vm955, %v945, %v946
    %v965 = vsel %vm955, %v944, %v945
    %v966 = vsel %vm955, %v943, %v944
    %v967 = vsel %vm955, %v942, %v943
    %v968 = vsel %vm955, %v941, %v942
    %v969 = vsel %vm955, %v940, %v941
    %v970 = vsel %vm955, %v939, %v940
    %v971 = vsel %vm955, %v938, %v939
    %v972 = vsel %vm955, %v937, %v938
    %v973 = vsel %vm955, %v936, %v937
    %v974 = vsel %vm955, %v935, %v936
    %v975 = vsel %vm955, %v934, %v935
    %v976 = vsel %vm955, %v933, %v934
    %v977 = vsel %vm955, %v932, %v933
    %v978 = vsel %vm955, %v931, %v932
    %v979 = vsel %vm955, %v930, %v931
    %v980 = vsel %vm955, %v929, %v930
    %v981 = vsel %vm955, %v928, %v929
    %v982 = vsel %vm955, %v927, %v928
    %v983 = vsel %vm955, %v926, %v927
    %v984 = vsel %vm955, %v925, %v926
    %v985 = vsel %vm955, %v924, %v925
    %v986 = vsel %vm955, %v923, %v924
    %v987 = vsel %vm955, %v922, %v923
    %v988 = vadd.f32 %v890, %v987
    %v989 = vadd.f32 %v891, %v986
    %v990 = vadd.f32 %v892, %v985
    %v991 = vadd.f32 %v893, %v984
    %v992 = vadd.f32 %v894, %v983
    %v993 = vadd.f32 %v895, %v982
    %v994 = vadd.f32 %v896, %v981
    %v995 = vadd.f32 %v897, %v980
    %v996 = vadd.f32 %v898, %v979
    %v997 = vadd.f32 %v899, %v978
    %v998 = vadd.f32 %v900, %v977
    %v999 = vadd.f32 %v901, %v976
    %v1000 = vadd.f32 %v902, %v975
    %v1001 = vadd.f32 %v903, %v974
    %v1002 = vadd.f32 %v904, %v973
    %v1003 = vadd.f32 %v905, %v972
    %v1004 = vadd.f32 %v906, %v971
    %v1005 = vadd.f32 %v907, %v970
    %v1006 = vadd.f32 %v908, %v969
    %v1007 = vadd.f32 %v909, %v968
    %v1008 = vadd.f32 %v910, %v967
    %v1009 = vadd.f32 %v911, %v966
    %v1010 = vadd.f32 %v912, %v965
    %v1011 = vadd.f32 %v913, %v964
    %v1012 = vadd.f32 %v914, %v963
    %v1013 = vadd.f32 %v915, %v962
    %v1014 = vadd.f32 %v916, %v961
    %v1015 = vadd.f32 %v917, %v960
    %v1016 = vadd.f32 %v918, %v959
    %v1017 = vadd.f32 %v919, %v958
    %v1018 = vadd.f32 %v920, %v957
    %v1019 = vadd.f32 %v921, %v956
    %v1020 = vpack.c.bf16 %v989, %v988
    %v1021 = vpack.c.bf16 %v991, %v990
    %v1022 = vpack.c.bf16 %v993, %v992
    %v1023 = vpack.c.bf16 %v995, %v994
    %v1024 = vpack.c.bf16 %v997, %v996
    %v1025 = vpack.c.bf16 %v999, %v998
    %v1026 = vpack.c.bf16 %v1001, %v1000
    %v1027 = vpack.c.bf16 %v1003, %v1002
    %v1028 = vpack.c.bf16 %v1005, %v1004
    %v1029 = vpack.c.bf16 %v1007, %v1006
    %v1030 = vpack.c.bf16 %v1009, %v1008
    %v1031 = vpack.c.bf16 %v1011, %v1010
    %v1032 = vpack.c.bf16 %v1013, %v1012
    %v1033 = vpack.c.bf16 %v1015, %v1014
    %v1034 = vpack.c.bf16 %v1017, %v1016
    %v1035 = vpack.c.bf16 %v1019, %v1018
    %v1036 = vld [vmem:[%s3] sm:$0xff]
    %v1037 = vld [vmem:[%s3 + $0x8] sm:$0xff]
    %v1038 = vld [vmem:[%s3 + $0x10] sm:$0xff]
    %v1039 = vld [vmem:[%s3 + $0x18] sm:$0xff]
    %v1040 = vld [vmem:[#allocation6] sm:$0xff]
    %v1041 = vld [vmem:[#allocation6 + $0x8] sm:$0xff]
    %v1042 = vld [vmem:[#allocation6 + $0x10] sm:$0xff]
    %v1043 = vld [vmem:[#allocation6 + $0x18] sm:$0xff]
    %v1044 = vld [vmem:[#allocation6 + $0x20] sm:$0xff]
    %v1045 = vld [vmem:[#allocation6 + $0x28] sm:$0xff]
    %v1046 = vld [vmem:[#allocation6 + $0x30] sm:$0xff]
    %v1047 = vld [vmem:[#allocation6 + $0x38] sm:$0xff]
    %v1048 = vld [vmem:[#allocation6 + $0x40] sm:$0xff]
    %v1049 = vld [vmem:[#allocation6 + $0x48] sm:$0xff]
    %v1050 = vld [vmem:[#allocation6 + $0x50] sm:$0xff]
    %v1051 = vld [vmem:[#allocation6 + $0x58] sm:$0xff]
    %v1052 = vld [vmem:[#allocation6 + $0x60] sm:$0xff]
    %v1053 = vld [vmem:[#allocation6 + $0x68] sm:$0xff]
    %v1054 = vld [vmem:[#allocation6 + $0x70] sm:$0xff]
    %v1055 = vld [vmem:[#allocation6 + $0x78] sm:$0xff]
    %v1056 = vld [vmem:[#allocation6 + $0x80] sm:$0xff]
    %v1057 = vld [vmem:[#allocation6 + $0x88] sm:$0xff]
    %v1058 = vld [vmem:[#allocation6 + $0x90] sm:$0xff]
    %v1059 = vld [vmem:[#allocation6 + $0x98] sm:$0xff]
    %v1060 = vld [vmem:[#allocation6 + $0xa0] sm:$0xff]
    %v1061 = vld [vmem:[#allocation6 + $0xa8] sm:$0xff]
    %v1062 = vld [vmem:[#allocation6 + $0xb0] sm:$0xff]
    %v1063 = vld [vmem:[#allocation6 + $0xb8] sm:$0xff]
    %v1064 = vld [vmem:[#allocation6 + $0xc0] sm:$0xff]
    %v1065 = vld [vmem:[#allocation6 + $0xc8] sm:$0xff]
    %v1066 = vld [vmem:[#allocation6 + $0xd0] sm:$0xff]
    %v1067 = vld [vmem:[#allocation6 + $0xd8] sm:$0xff]
    %v1068 = vld [vmem:[#allocation6 + $0xe0] sm:$0xff]
    %v1069 = vld [vmem:[#allocation6 + $0xe8] sm:$0xff]
    %v1070 = vld [vmem:[#allocation6 + $0xf0] sm:$0xff]
    %v1071 = vld [vmem:[#allocation6 + $0xf8] sm:$0xff]
    %v1072 = vld [vmem:[%s4] sm:$0xff]
    %v1073 = vld [vmem:[%s4 + $0x8] sm:$0xff]
    %v1074 = vld [vmem:[%s4 + $0x10] sm:$0xff]
    %v1075 = vld [vmem:[%s4 + $0x18] sm:$0xff]
    %1077 = vset.pattern.permute.xlu0 0
    %1078 = vperm.xlu0 %1077, %v1072
    %v1079 = vpop.permute.xlu0 %1078
    %1082 = vset.pattern.permute.xlu0 0
    %1083 = vperm.xlu0 %1082, %v1073
    %v1084 = vpop.permute.xlu0 %1083
    %1087 = vset.pattern.permute.xlu0 0
    %1088 = vperm.xlu0 %1087, %v1074
    %v1089 = vpop.permute.xlu0 %1088
    %1092 = vset.pattern.permute.xlu0 0
    %1093 = vperm.xlu0 %1092, %v1075
    %v1094 = vpop.permute.xlu0 %1093
    %v1100 = vunpack.c.l.b16 %v1036
    %v1101 = vunpack.c.h.b16 %v1036
    %v1102 = vunpack.c.l.b16 %v1037
    %v1103 = vunpack.c.h.b16 %v1037
    %v1104 = vunpack.c.l.b16 %v1038
    %v1105 = vunpack.c.h.b16 %v1038
    %v1106 = vunpack.c.l.b16 %v1039
    %v1107 = vunpack.c.h.b16 %v1039
    %v1108 = vpack.c.b16 %v1102, %v1100
    %v1109 = vpack.c.b16 %v1103, %v1101
    %v1110 = vpack.c.b16 %v1106, %v1104
    %v1111 = vpack.c.b16 %v1107, %v1105
    %v1148 = vunpack.c.l.b16 %v1040
    %v1149 = vunpack.c.h.b16 %v1040
    %v1150 = vunpack.c.l.b16 %v1041
    %v1151 = vunpack.c.h.b16 %v1041
    %v1152 = vunpack.c.l.b16 %v1042
    %v1153 = vunpack.c.h.b16 %v1042
    %v1154 = vunpack.c.l.b16 %v1043
    %v1155 = vunpack.c.h.b16 %v1043
    %v1156 = vunpack.c.l.b16 %v1044
    %v1157 = vunpack.c.h.b16 %v1044
    %v1158 = vunpack.c.l.b16 %v1045
    %v1159 = vunpack.c.h.b16 %v1045
    %v1160 = vunpack.c.l.b16 %v1046
    %v1161 = vunpack.c.h.b16 %v1046
    %v1162 = vunpack.c.l.b16 %v1047
    %v1163 = vunpack.c.h.b16 %v1047
    %v1164 = vunpack.c.l.b16 %v1048
    %v1165 = vunpack.c.h.b16 %v1048
    %v1166 = vunpack.c.l.b16 %v1049
    %v1167 = vunpack.c.h.b16 %v1049
    %v1168 = vunpack.c.l.b16 %v1050
    %v1169 = vunpack.c.h.b16 %v1050
    %v1170 = vunpack.c.l.b16 %v1051
    %v1171 = vunpack.c.h.b16 %v1051
    %v1172 = vunpack.c.l.b16 %v1052
    %v1173 = vunpack.c.h.b16 %v1052
    %v1174 = vunpack.c.l.b16 %v1053
    %v1175 = vunpack.c.h.b16 %v1053
    %v1176 = vunpack.c.l.b16 %v1054
    %v1177 = vunpack.c.h.b16 %v1054
    %v1178 = vunpack.c.l.b16 %v1055
    %v1179 = vunpack.c.h.b16 %v1055
    %v1180 = vunpack.c.l.b16 %v1056
    %v1181 = vunpack.c.h.b16 %v1056
    %v1182 = vunpack.c.l.b16 %v1057
    %v1183 = vunpack.c.h.b16 %v1057
    %v1184 = vunpack.c.l.b16 %v1058
    %v1185 = vunpack.c.h.b16 %v1058
    %v1186 = vunpack.c.l.b16 %v1059
    %v1187 = vunpack.c.h.b16 %v1059
    %v1188 = vunpack.c.l.b16 %v1060
    %v1189 = vunpack.c.h.b16 %v1060
    %v1190 = vunpack.c.l.b16 %v1061
    %v1191 = vunpack.c.h.b16 %v1061
    %v1192 = vunpack.c.l.b16 %v1062
    %v1193 = vunpack.c.h.b16 %v1062
    %v1194 = vunpack.c.l.b16 %v1063
    %v1195 = vunpack.c.h.b16 %v1063
    %v1196 = vunpack.c.l.b16 %v1064
    %v1197 = vunpack.c.h.b16 %v1064
    %v1198 = vunpack.c.l.b16 %v1065
    %v1199 = vunpack.c.h.b16 %v1065
    %v1200 = vunpack.c.l.b16 %v1066
    %v1201 = vunpack.c.h.b16 %v1066
    %v1202 = vunpack.c.l.b16 %v1067
    %v1203 = vunpack.c.h.b16 %v1067
    %v1204 = vunpack.c.l.b16 %v1068
    %v1205 = vunpack.c.h.b16 %v1068
    %v1206 = vunpack.c.l.b16 %v1069
    %v1207 = vunpack.c.h.b16 %v1069
    %v1208 = vunpack.c.l.b16 %v1070
    %v1209 = vunpack.c.h.b16 %v1070
    %v1210 = vunpack.c.l.b16 %v1071
    %v1211 = vunpack.c.h.b16 %v1071
    %v1212 = vpack.c.b16 %v1150, %v1148
    %v1213 = vpack.c.b16 %v1151, %v1149
    %v1214 = vpack.c.b16 %v1154, %v1152
    %v1215 = vpack.c.b16 %v1155, %v1153
    %v1216 = vpack.c.b16 %v1158, %v1156
    %v1217 = vpack.c.b16 %v1159, %v1157
    %v1218 = vpack.c.b16 %v1162, %v1160
    %v1219 = vpack.c.b16 %v1163, %v1161
    %v1220 = vpack.c.b16 %v1166, %v1164
    %v1221 = vpack.c.b16 %v1167, %v1165
    %v1222 = vpack.c.b16 %v1170, %v1168
    %v1223 = vpack.c.b16 %v1171, %v1169
    %v1224 = vpack.c.b16 %v1174, %v1172
    %v1225 = vpack.c.b16 %v1175, %v1173
    %v1226 = vpack.c.b16 %v1178, %v1176
    %v1227 = vpack.c.b16 %v1179, %v1177
    %v1228 = vpack.c.b16 %v1182, %v1180
    %v1229 = vpack.c.b16 %v1183, %v1181
    %v1230 = vpack.c.b16 %v1186, %v1184
    %v1231 = vpack.c.b16 %v1187, %v1185
    %v1232 = vpack.c.b16 %v1190, %v1188
    %v1233 = vpack.c.b16 %v1191, %v1189
    %v1234 = vpack.c.b16 %v1194, %v1192
    %v1235 = vpack.c.b16 %v1195, %v1193
    %v1236 = vpack.c.b16 %v1198, %v1196
    %v1237 = vpack.c.b16 %v1199, %v1197
    %v1238 = vpack.c.b16 %v1202, %v1200
    %v1239 = vpack.c.b16 %v1203, %v1201
    %v1240 = vpack.c.b16 %v1206, %v1204
    %v1241 = vpack.c.b16 %v1207, %v1205
    %v1242 = vpack.c.b16 %v1210, %v1208
    %v1243 = vpack.c.b16 %v1211, %v1209
    %1276 = vmatprep.subr.bf16.mxu0 %v1227
    %1277 = vmatpush1.bf16.msra.mxu0 %v1226
    %1278 = vmatprep.subr.bf16.mxu0 %v1225
    %1279 = vmatpush1.bf16.msra.mxu0 %v1224
    %1280 = vmatprep.subr.bf16.mxu0 %v1223
    %1281 = vmatpush1.bf16.msra.mxu0 %v1222
    %1282 = vmatprep.subr.bf16.mxu0 %v1221
    %1283 = vmatpush1.bf16.msra.mxu0 %v1220
    %1284 = vmatprep.subr.bf16.mxu0 %v1219
    %1285 = vmatpush1.bf16.msra.mxu0 %v1218
    %1286 = vmatprep.subr.bf16.mxu0 %v1217
    %1287 = vmatpush1.bf16.msra.mxu0 %v1216
    %1288 = vmatprep.subr.bf16.mxu0 %v1215
    %1289 = vmatpush1.bf16.msra.mxu0 %v1214
    %1290 = vmatprep.subr.bf16.mxu0 %v1213
    %1291 = vmatpush1.bf16.msra.mxu0 %v1212
    %1292 = vmatprep.subr.bf16.mxu0 %v1243
    %1293 = vmatpush2.bf16.msra.mxu0 %v1242
    %1294 = vmatprep.subr.bf16.mxu0 %v1241
    %1295 = vmatpush2.bf16.msra.mxu0 %v1240
    %1296 = vmatprep.subr.bf16.mxu0 %v1239
    %1297 = vmatpush2.bf16.msra.mxu0 %v1238
    %1298 = vmatprep.subr.bf16.mxu0 %v1237
    %1299 = vmatpush2.bf16.msra.mxu0 %v1236
    %1300 = vmatprep.subr.bf16.mxu0 %v1235
    %1301 = vmatpush2.bf16.msra.mxu0 %v1234
    %1302 = vmatprep.subr.bf16.mxu0 %v1233
    %1303 = vmatpush2.bf16.msra.mxu0 %v1232
    %1304 = vmatprep.subr.bf16.mxu0 %v1231
    %1305 = vmatpush2.bf16.msra.mxu0 %v1230
    %1306 = vmatprep.subr.bf16.mxu0 %v1229
    %1307 = vmatpush2.bf16.msra.mxu0 %v1228
    %1308 = vmatprep.mubr.bf16.mxu0 %v1109
    %1309 = vmatmul.mubr.bf16.gmra.mxu0 %v1108
    %v1310 = vpop.f32.mrf.mxu0
    %v1311 = vadd.f32 %v1079, %v1310
    %v1312 = vpop.f32.mrf.mxu0
    %v1313 = vadd.f32 %v1079, %v1312
    %v1314 = vpop.f32.mrf.mxu0
    %v1315 = vadd.f32 %v1084, %v1314
    %v1316 = vpop.f32.mrf.mxu0
    %v1317 = vadd.f32 %v1084, %v1316
    %1318 = vmatprep.mubr.bf16.mxu0 %v1111
    %1319 = vmatmul.mubr.bf16.gmra.mxu0 %v1110
    %v1320 = vpop.f32.mrf.mxu0
    %v1321 = vadd.f32 %v1089, %v1320
    %v1322 = vpop.f32.mrf.mxu0
    %v1323 = vadd.f32 %v1089, %v1322
    %v1324 = vpop.f32.mrf.mxu0
    %v1325 = vadd.f32 %v1094, %v1324
    %v1326 = vpop.f32.mrf.mxu0
    %v1327 = vadd.f32 %v1094, %v1326
    %1328 = vdwg.mxu0
    %v1329 = vpack.c.bf16 %v1315, %v1311
    %v1330 = vpack.c.bf16 %v1317, %v1313
    %v1331 = vpack.c.bf16 %v1325, %v1321
    %v1332 = vpack.c.bf16 %v1327, %v1323
    %v1333 = vld [vmem:[#allocation8] sm:$0xff]
    %v1334 = vld [vmem:[#allocation8 + $0x8] sm:$0xff]
    %v1335 = vld [vmem:[#allocation8 + $0x10] sm:$0xff]
    %v1336 = vld [vmem:[#allocation8 + $0x18] sm:$0xff]
    %v1337 = vld [vmem:[#allocation8 + $0x20] sm:$0xff]
    %v1338 = vld [vmem:[#allocation8 + $0x28] sm:$0xff]
    %v1339 = vld [vmem:[#allocation8 + $0x30] sm:$0xff]
    %v1340 = vld [vmem:[#allocation8 + $0x38] sm:$0xff]
    %v1341 = vld [vmem:[#allocation8 + $0x40] sm:$0xff]
    %v1342 = vld [vmem:[#allocation8 + $0x48] sm:$0xff]
    %v1343 = vld [vmem:[#allocation8 + $0x50] sm:$0xff]
    %v1344 = vld [vmem:[#allocation8 + $0x58] sm:$0xff]
    %v1345 = vld [vmem:[#allocation8 + $0x60] sm:$0xff]
    %v1346 = vld [vmem:[#allocation8 + $0x68] sm:$0xff]
    %v1347 = vld [vmem:[#allocation8 + $0x70] sm:$0xff]
    %v1348 = vld [vmem:[#allocation8 + $0x78] sm:$0xff]
    %v1349 = vld [vmem:[#allocation8 + $0x80] sm:$0xff]
    %v1350 = vld [vmem:[#allocation8 + $0x88] sm:$0xff]
    %v1351 = vld [vmem:[#allocation8 + $0x90] sm:$0xff]
    %v1352 = vld [vmem:[#allocation8 + $0x98] sm:$0xff]
    %v1353 = vld [vmem:[#allocation8 + $0xa0] sm:$0xff]
    %v1354 = vld [vmem:[#allocation8 + $0xa8] sm:$0xff]
    %v1355 = vld [vmem:[#allocation8 + $0xb0] sm:$0xff]
    %v1356 = vld [vmem:[#allocation8 + $0xb8] sm:$0xff]
    %v1357 = vld [vmem:[#allocation8 + $0xc0] sm:$0xff]
    %v1358 = vld [vmem:[#allocation8 + $0xc8] sm:$0xff]
    %v1359 = vld [vmem:[#allocation8 + $0xd0] sm:$0xff]
    %v1360 = vld [vmem:[#allocation8 + $0xd8] sm:$0xff]
    %v1361 = vld [vmem:[#allocation8 + $0xe0] sm:$0xff]
    %v1362 = vld [vmem:[#allocation8 + $0xe8] sm:$0xff]
    %v1363 = vld [vmem:[#allocation8 + $0xf0] sm:$0xff]
    %v1364 = vld [vmem:[#allocation8 + $0xf8] sm:$0xff]
    %v1365 = vunpack.c.l.bf16 %v1333
    %v1366 = vunpack.c.h.bf16 %v1333
    %v1367 = vunpack.c.l.bf16 %v1334
    %v1368 = vunpack.c.h.bf16 %v1334
    %v1369 = vunpack.c.l.bf16 %v1335
    %v1370 = vunpack.c.h.bf16 %v1335
    %v1371 = vunpack.c.l.bf16 %v1336
    %v1372 = vunpack.c.h.bf16 %v1336
    %v1373 = vunpack.c.l.bf16 %v1337
    %v1374 = vunpack.c.h.bf16 %v1337
    %v1375 = vunpack.c.l.bf16 %v1338
    %v1376 = vunpack.c.h.bf16 %v1338
    %v1377 = vunpack.c.l.bf16 %v1339
    %v1378 = vunpack.c.h.bf16 %v1339
    %v1379 = vunpack.c.l.bf16 %v1340
    %v1380 = vunpack.c.h.bf16 %v1340
    %v1381 = vunpack.c.l.bf16 %v1341
    %v1382 = vunpack.c.h.bf16 %v1341
    %v1383 = vunpack.c.l.bf16 %v1342
    %v1384 = vunpack.c.h.bf16 %v1342
    %v1385 = vunpack.c.l.bf16 %v1343
    %v1386 = vunpack.c.h.bf16 %v1343
    %v1387 = vunpack.c.l.bf16 %v1344
    %v1388 = vunpack.c.h.bf16 %v1344
    %v1389 = vunpack.c.l.bf16 %v1345
    %v1390 = vunpack.c.h.bf16 %v1345
    %v1391 = vunpack.c.l.bf16 %v1346
    %v1392 = vunpack.c.h.bf16 %v1346
    %v1393 = vunpack.c.l.bf16 %v1347
    %v1394 = vunpack.c.h.bf16 %v1347
    %v1395 = vunpack.c.l.bf16 %v1348
    %v1396 = vunpack.c.h.bf16 %v1348
    %v1397 = vunpack.c.l.bf16 %v1349
    %v1398 = vunpack.c.h.bf16 %v1349
    %v1399 = vunpack.c.l.bf16 %v1350
    %v1400 = vunpack.c.h.bf16 %v1350
    %v1401 = vunpack.c.l.bf16 %v1351
    %v1402 = vunpack.c.h.bf16 %v1351
    %v1403 = vunpack.c.l.bf16 %v1352
    %v1404 = vunpack.c.h.bf16 %v1352
    %v1405 = vunpack.c.l.bf16 %v1353
    %v1406 = vunpack.c.h.bf16 %v1353
    %v1407 = vunpack.c.l.bf16 %v1354
    %v1408 = vunpack.c.h.bf16 %v1354
    %v1409 = vunpack.c.l.bf16 %v1355
    %v1410 = vunpack.c.h.bf16 %v1355
    %v1411 = vunpack.c.l.bf16 %v1356
    %v1412 = vunpack.c.h.bf16 %v1356
    %v1413 = vunpack.c.l.bf16 %v1357
    %v1414 = vunpack.c.h.bf16 %v1357
    %v1415 = vunpack.c.l.bf16 %v1358
    %v1416 = vunpack.c.h.bf16 %v1358
    %v1417 = vunpack.c.l.bf16 %v1359
    %v1418 = vunpack.c.h.bf16 %v1359
    %v1419 = vunpack.c.l.bf16 %v1360
    %v1420 = vunpack.c.h.bf16 %v1360
    %v1421 = vunpack.c.l.bf16 %v1361
    %v1422 = vunpack.c.h.bf16 %v1361
    %v1423 = vunpack.c.l.bf16 %v1362
    %v1424 = vunpack.c.h.bf16 %v1362
    %v1425 = vunpack.c.l.bf16 %v1363
    %v1426 = vunpack.c.h.bf16 %v1363
    %v1427 = vunpack.c.l.bf16 %v1364
    %v1428 = vunpack.c.h.bf16 %v1364
    %v1430 = vsel %vm557, %v1020, 0
    %v1433 = vsel %vm557, %v1021, 0
    %v1436 = vsel %vm557, %v1022, 0
    %v1439 = vsel %vm557, %v1023, 0
    %v1442 = vsel %vm557, %v1024, 0
    %v1445 = vsel %vm557, %v1025, 0
    %v1448 = vsel %vm557, %v1026, 0
    %v1451 = vsel %vm557, %v1027, 0
    %v1454 = vsel %vm557, %v1028, 0
    %v1457 = vsel %vm557, %v1029, 0
    %v1460 = vsel %vm557, %v1030, 0
    %v1463 = vsel %vm557, %v1031, 0
    %v1466 = vsel %vm557, %v1032, 0
    %v1469 = vsel %vm557, %v1033, 0
    %v1472 = vsel %vm557, %v1034, 0
    %v1475 = vsel %vm557, %v1035, 0
    %1477 = vmatprep.subr.bf16.mxu0 0
    %1478 = vmatpush1.bf16.msra.mxu0 0
    %1479 = vmatprep.subr.bf16.mxu0 0
    %1480 = vmatpush1.bf16.msra.mxu0 0
    %1481 = vmatprep.subr.bf16.mxu0 0
    %1482 = vmatpush1.bf16.msra.mxu0 0
    %1483 = vmatprep.subr.bf16.mxu0 0
    %1484 = vmatpush1.bf16.msra.mxu0 0
    %1485 = vmatprep.subr.bf16.mxu0 0
    %1486 = vmatpush1.bf16.msra.mxu0 0
    %1487 = vmatprep.subr.bf16.mxu0 0
    %1488 = vmatpush1.bf16.msra.mxu0 0
    %1489 = vmatprep.subr.bf16.mxu0 %v1332
    %1490 = vmatpush1.bf16.msra.mxu0 %v1331
    %1491 = vmatprep.subr.bf16.mxu0 %v1330
    %1492 = vmatpush1.bf16.msra.mxu0 %v1329
    %1493 = vmatprep.subr.bf16.mxu0 0
    %1494 = vmatpush2.bf16.msra.mxu0 0
    %1495 = vmatprep.subr.bf16.mxu0 0
    %1496 = vmatpush2.bf16.msra.mxu0 0
    %1497 = vmatprep.subr.bf16.mxu0 0
    %1498 = vmatpush2.bf16.msra.mxu0 0
    %1499 = vmatprep.subr.bf16.mxu0 0
    %1500 = vmatpush2.bf16.msra.mxu0 0
    %1501 = vmatprep.subr.bf16.mxu0 0
    %1502 = vmatpush2.bf16.msra.mxu0 0
    %1503 = vmatprep.subr.bf16.mxu0 0
    %1504 = vmatpush2.bf16.msra.mxu0 0
    %1505 = vmatprep.subr.bf16.mxu0 0
    %1506 = vmatpush2.bf16.msra.mxu0 0
    %1507 = vmatprep.subr.bf16.mxu0 0
    %1508 = vmatpush2.bf16.msra.mxu0 0
    %1509 = vmatprep.mubr.bf16.mxu0 0
    %1510 = vmatmul.mubr.bf16.gmra.mxu0 %v1430
    %v1511 = vpop.f32.mrf.mxu0
    %v1512 = vadd.f32 %v1365, %v1511
    %v1513 = vpop.f32.mrf.mxu0
    %v1514 = vadd.f32 %v1366, %v1513
    %v1515 = vpop.f32.mrf.mxu0
    %v1516 = vadd.f32 %v1367, %v1515
    %v1517 = vpop.f32.mrf.mxu0
    %v1518 = vadd.f32 %v1368, %v1517
    %1519 = vmatprep.mubr.bf16.mxu0 0
    %1520 = vmatmul.mubr.bf16.gmra.mxu0 %v1433
    %v1521 = vpop.f32.mrf.mxu0
    %v1522 = vadd.f32 %v1369, %v1521
    %v1523 = vpop.f32.mrf.mxu0
    %v1524 = vadd.f32 %v1370, %v1523
    %v1525 = vpop.f32.mrf.mxu0
    %v1526 = vadd.f32 %v1371, %v1525
    %v1527 = vpop.f32.mrf.mxu0
    %v1528 = vadd.f32 %v1372, %v1527
    %1529 = vmatprep.mubr.bf16.mxu0 0
    %1530 = vmatmul.mubr.bf16.gmra.mxu0 %v1436
    %v1531 = vpop.f32.mrf.mxu0
    %v1532 = vadd.f32 %v1373, %v1531
    %v1533 = vpop.f32.mrf.mxu0
    %v1534 = vadd.f32 %v1374, %v1533
    %v1535 = vpop.f32.mrf.mxu0
    %v1536 = vadd.f32 %v1375, %v1535
    %v1537 = vpop.f32.mrf.mxu0
    %v1538 = vadd.f32 %v1376, %v1537
    %1539 = vmatprep.mubr.bf16.mxu0 0
    %1540 = vmatmul.mubr.bf16.gmra.mxu0 %v1439
    %v1541 = vpop.f32.mrf.mxu0
    %v1542 = vadd.f32 %v1377, %v1541
    %v1543 = vpop.f32.mrf.mxu0
    %v1544 = vadd.f32 %v1378, %v1543
    %v1545 = vpop.f32.mrf.mxu0
    %v1546 = vadd.f32 %v1379, %v1545
    %v1547 = vpop.f32.mrf.mxu0
    %v1548 = vadd.f32 %v1380, %v1547
    %1549 = vmatprep.mubr.bf16.mxu0 0
    %1550 = vmatmul.mubr.bf16.gmra.mxu0 %v1442
    %v1551 = vpop.f32.mrf.mxu0
    %v1552 = vadd.f32 %v1381, %v1551
    %v1553 = vpop.f32.mrf.mxu0
    %v1554 = vadd.f32 %v1382, %v1553
    %v1555 = vpop.f32.mrf.mxu0
    %v1556 = vadd.f32 %v1383, %v1555
    %v1557 = vpop.f32.mrf.mxu0
    %v1558 = vadd.f32 %v1384, %v1557
    %1559 = vmatprep.mubr.bf16.mxu0 0
    %1560 = vmatmul.mubr.bf16.gmra.mxu0 %v1445
    %v1561 = vpop.f32.mrf.mxu0
    %v1562 = vadd.f32 %v1385, %v1561
    %v1563 = vpop.f32.mrf.mxu0
    %v1564 = vadd.f32 %v1386, %v1563
    %v1565 = vpop.f32.mrf.mxu0
    %v1566 = vadd.f32 %v1387, %v1565
    %v1567 = vpop.f32.mrf.mxu0
    %v1568 = vadd.f32 %v1388, %v1567
    %1569 = vmatprep.mubr.bf16.mxu0 0
    %1570 = vmatmul.mubr.bf16.gmra.mxu0 %v1448
    %v1571 = vpop.f32.mrf.mxu0
    %v1572 = vadd.f32 %v1389, %v1571
    %v1573 = vpop.f32.mrf.mxu0
    %v1574 = vadd.f32 %v1390, %v1573
    %v1575 = vpop.f32.mrf.mxu0
    %v1576 = vadd.f32 %v1391, %v1575
    %v1577 = vpop.f32.mrf.mxu0
    %v1578 = vadd.f32 %v1392, %v1577
    %1579 = vmatprep.mubr.bf16.mxu0 0
    %1580 = vmatmul.mubr.bf16.gmra.mxu0 %v1451
    %v1581 = vpop.f32.mrf.mxu0
    %v1582 = vadd.f32 %v1393, %v1581
    %v1583 = vpop.f32.mrf.mxu0
    %v1584 = vadd.f32 %v1394, %v1583
    %v1585 = vpop.f32.mrf.mxu0
    %v1586 = vadd.f32 %v1395, %v1585
    %v1587 = vpop.f32.mrf.mxu0
    %v1588 = vadd.f32 %v1396, %v1587
    %1589 = vmatprep.mubr.bf16.mxu0 0
    %1590 = vmatmul.mubr.bf16.gmra.mxu0 %v1454
    %v1591 = vpop.f32.mrf.mxu0
    %v1592 = vadd.f32 %v1397, %v1591
    %v1593 = vpop.f32.mrf.mxu0
    %v1594 = vadd.f32 %v1398, %v1593
    %v1595 = vpop.f32.mrf.mxu0
    %v1596 = vadd.f32 %v1399, %v1595
    %v1597 = vpop.f32.mrf.mxu0
    %v1598 = vadd.f32 %v1400, %v1597
    %1599 = vmatprep.mubr.bf16.mxu0 0
    %1600 = vmatmul.mubr.bf16.gmra.mxu0 %v1457
    %v1601 = vpop.f32.mrf.mxu0
    %v1602 = vadd.f32 %v1401, %v1601
    %v1603 = vpop.f32.mrf.mxu0
    %v1604 = vadd.f32 %v1402, %v1603
    %v1605 = vpop.f32.mrf.mxu0
    %v1606 = vadd.f32 %v1403, %v1605
    %v1607 = vpop.f32.mrf.mxu0
    %v1608 = vadd.f32 %v1404, %v1607
    %1609 = vmatprep.mubr.bf16.mxu0 0
    %1610 = vmatmul.mubr.bf16.gmra.mxu0 %v1460
    %v1611 = vpop.f32.mrf.mxu0
    %v1612 = vadd.f32 %v1405, %v1611
    %v1613 = vpop.f32.mrf.mxu0
    %v1614 = vadd.f32 %v1406, %v1613
    %v1615 = vpop.f32.mrf.mxu0
    %v1616 = vadd.f32 %v1407, %v1615
    %v1617 = vpop.f32.mrf.mxu0
    %v1618 = vadd.f32 %v1408, %v1617
    %1619 = vmatprep.mubr.bf16.mxu0 0
    %1620 = vmatmul.mubr.bf16.gmra.mxu0 %v1463
    %v1621 = vpop.f32.mrf.mxu0
    %v1622 = vadd.f32 %v1409, %v1621
    %v1623 = vpop.f32.mrf.mxu0
    %v1624 = vadd.f32 %v1410, %v1623
    %v1625 = vpop.f32.mrf.mxu0
    %v1626 = vadd.f32 %v1411, %v1625
    %v1627 = vpop.f32.mrf.mxu0
    %v1628 = vadd.f32 %v1412, %v1627
    %1629 = vmatprep.mubr.bf16.mxu0 0
    %1630 = vmatmul.mubr.bf16.gmra.mxu0 %v1466
    %v1631 = vpop.f32.mrf.mxu0
    %v1632 = vadd.f32 %v1413, %v1631
    %v1633 = vpop.f32.mrf.mxu0
    %v1634 = vadd.f32 %v1414, %v1633
    %v1635 = vpop.f32.mrf.mxu0
    %v1636 = vadd.f32 %v1415, %v1635
    %v1637 = vpop.f32.mrf.mxu0
    %v1638 = vadd.f32 %v1416, %v1637
    %1639 = vmatprep.mubr.bf16.mxu0 0
    %1640 = vmatmul.mubr.bf16.gmra.mxu0 %v1469
    %v1641 = vpop.f32.mrf.mxu0
    %v1642 = vadd.f32 %v1417, %v1641
    %v1643 = vpop.f32.mrf.mxu0
    %v1644 = vadd.f32 %v1418, %v1643
    %v1645 = vpop.f32.mrf.mxu0
    %v1646 = vadd.f32 %v1419, %v1645
    %v1647 = vpop.f32.mrf.mxu0
    %v1648 = vadd.f32 %v1420, %v1647
    %1649 = vmatprep.mubr.bf16.mxu0 0
    %1650 = vmatmul.mubr.bf16.gmra.mxu0 %v1472
    %v1651 = vpop.f32.mrf.mxu0
    %v1652 = vadd.f32 %v1421, %v1651
    %v1653 = vpop.f32.mrf.mxu0
    %v1654 = vadd.f32 %v1422, %v1653
    %v1655 = vpop.f32.mrf.mxu0
    %v1656 = vadd.f32 %v1423, %v1655
    %v1657 = vpop.f32.mrf.mxu0
    %v1658 = vadd.f32 %v1424, %v1657
    %1659 = vmatprep.mubr.bf16.mxu0 0
    %1660 = vmatmul.mubr.bf16.gmra.mxu0 %v1475
    %v1661 = vpop.f32.mrf.mxu0
    %v1662 = vadd.f32 %v1425, %v1661
    %v1663 = vpop.f32.mrf.mxu0
    %v1664 = vadd.f32 %v1426, %v1663
    %v1665 = vpop.f32.mrf.mxu0
    %v1666 = vadd.f32 %v1427, %v1665
    %v1667 = vpop.f32.mrf.mxu0
    %v1668 = vadd.f32 %v1428, %v1667
    %1669 = vdwg.mxu0
    %v1670 = vmax.f32 %v1512, %v1522
    %v1671 = vmax.f32 %v1516, %v1526
    %v1672 = vmax.f32 %v1670, %v1532
    %v1673 = vmax.f32 %v1671, %v1536
    %v1674 = vmax.f32 %v1672, %v1542
    %v1675 = vmax.f32 %v1673, %v1546
    %v1676 = vmax.f32 %v1674, %v1552
    %v1677 = vmax.f32 %v1675, %v1556
    %v1678 = vmax.f32 %v1676, %v1562
    %v1679 = vmax.f32 %v1677, %v1566
    %v1680 = vmax.f32 %v1678, %v1572
    %v1681 = vmax.f32 %v1679, %v1576
    %v1682 = vmax.f32 %v1680, %v1582
    %v1683 = vmax.f32 %v1681, %v1586
    %v1684 = vmax.f32 %v1682, %v1592
    %v1685 = vmax.f32 %v1683, %v1596
    %v1686 = vmax.f32 %v1684, %v1602
    %v1687 = vmax.f32 %v1685, %v1606
    %v1688 = vmax.f32 %v1686, %v1612
    %v1689 = vmax.f32 %v1687, %v1616
    %v1690 = vmax.f32 %v1688, %v1622
    %v1691 = vmax.f32 %v1689, %v1626
    %v1692 = vmax.f32 %v1690, %v1632
    %v1693 = vmax.f32 %v1691, %v1636
    %v1694 = vmax.f32 %v1692, %v1642
    %v1695 = vmax.f32 %v1693, %v1646
    %v1696 = vmax.f32 %v1694, %v1652
    %v1697 = vmax.f32 %v1695, %v1656
    %v1698 = vmax.f32 %v1696, %v1662
    %v1699 = vmax.f32 %v1697, %v1666
    %v1700 = vmax.f32 %v1698, %v1699
    %v1701 = vrot.slane %v1700, 4
    %v1702 = vmax.f32 %v1700, %v1701
    %v1703 = vrot.slane %v1702, 2
    %v1704 = vmax.f32 %v1702, %v1703
    %v1705 = vrot.slane %v1704, 1
    %v1706 = vmax.f32 %v1704, %v1705
    %v1707 = vmax.f32 %v1514, %v1524
    %v1708 = vmax.f32 %v1518, %v1528
    %v1709 = vmax.f32 %v1707, %v1534
    %v1710 = vmax.f32 %v1708, %v1538
    %v1711 = vmax.f32 %v1709, %v1544
    %v1712 = vmax.f32 %v1710, %v1548
    %v1713 = vmax.f32 %v1711, %v1554
    %v1714 = vmax.f32 %v1712, %v1558
    %v1715 = vmax.f32 %v1713, %v1564
    %v1716 = vmax.f32 %v1714, %v1568
    %v1717 = vmax.f32 %v1715, %v1574
    %v1718 = vmax.f32 %v1716, %v1578
    %v1719 = vmax.f32 %v1717, %v1584
    %v1720 = vmax.f32 %v1718, %v1588
    %v1721 = vmax.f32 %v1719, %v1594
    %v1722 = vmax.f32 %v1720, %v1598
    %v1723 = vmax.f32 %v1721, %v1604
    %v1724 = vmax.f32 %v1722, %v1608
    %v1725 = vmax.f32 %v1723, %v1614
    %v1726 = vmax.f32 %v1724, %v1618
    %v1727 = vmax.f32 %v1725, %v1624
    %v1728 = vmax.f32 %v1726, %v1628
    %v1729 = vmax.f32 %v1727, %v1634
    %v1730 = vmax.f32 %v1728, %v1638
    %v1731 = vmax.f32 %v1729, %v1644
    %v1732 = vmax.f32 %v1730, %v1648
    %v1733 = vmax.f32 %v1731, %v1654
    %v1734 = vmax.f32 %v1732, %v1658
    %v1735 = vmax.f32 %v1733, %v1664
    %v1736 = vmax.f32 %v1734, %v1668
    %v1737 = vmax.f32 %v1735, %v1736
    %v1738 = vrot.slane %v1737, 4
    %v1739 = vmax.f32 %v1737, %v1738
    %v1740 = vrot.slane %v1739, 2
    %v1741 = vmax.f32 %v1739, %v1740
    %v1742 = vrot.slane %v1741, 1
    %v1743 = vmax.f32 %v1741, %v1742
    %v1744 = vsub.f32 %v1512, %v1706
    %v1745 = vsub.f32 %v1514, %v1743
    %v1746 = vsub.f32 %v1516, %v1706
    %v1747 = vsub.f32 %v1518, %v1743
    %v1748 = vsub.f32 %v1522, %v1706
    %v1749 = vsub.f32 %v1524, %v1743
    %v1750 = vsub.f32 %v1526, %v1706
    %v1751 = vsub.f32 %v1528, %v1743
    %v1752 = vsub.f32 %v1532, %v1706
    %v1753 = vsub.f32 %v1534, %v1743
    %v1754 = vsub.f32 %v1536, %v1706
    %v1755 = vsub.f32 %v1538, %v1743
    %v1756 = vsub.f32 %v1542, %v1706
    %v1757 = vsub.f32 %v1544, %v1743
    %v1758 = vsub.f32 %v1546, %v1706
    %v1759 = vsub.f32 %v1548, %v1743
    %v1760 = vsub.f32 %v1552, %v1706
    %v1761 = vsub.f32 %v1554, %v1743
    %v1762 = vsub.f32 %v1556, %v1706
    %v1763 = vsub.f32 %v1558, %v1743
    %v1764 = vsub.f32 %v1562, %v1706
    %v1765 = vsub.f32 %v1564, %v1743
    %v1766 = vsub.f32 %v1566, %v1706
    %v1767 = vsub.f32 %v1568, %v1743
    %v1768 = vsub.f32 %v1572, %v1706
    %v1769 = vsub.f32 %v1574, %v1743
    %v1770 = vsub.f32 %v1576, %v1706
    %v1771 = vsub.f32 %v1578, %v1743
    %v1772 = vsub.f32 %v1582, %v1706
    %v1773 = vsub.f32 %v1584, %v1743
    %v1774 = vsub.f32 %v1586, %v1706
    %v1775 = vsub.f32 %v1588, %v1743
    %v1776 = vsub.f32 %v1592, %v1706
    %v1777 = vsub.f32 %v1594, %v1743
    %v1778 = vsub.f32 %v1596, %v1706
    %v1779 = vsub.f32 %v1598, %v1743
    %v1780 = vsub.f32 %v1602, %v1706
    %v1781 = vsub.f32 %v1604, %v1743
    %v1782 = vsub.f32 %v1606, %v1706
    %v1783 = vsub.f32 %v1608, %v1743
    %v1784 = vsub.f32 %v1612, %v1706
    %v1785 = vsub.f32 %v1614, %v1743
    %v1786 = vsub.f32 %v1616, %v1706
    %v1787 = vsub.f32 %v1618, %v1743
    %v1788 = vsub.f32 %v1622, %v1706
    %v1789 = vsub.f32 %v1624, %v1743
    %v1790 = vsub.f32 %v1626, %v1706
    %v1791 = vsub.f32 %v1628, %v1743
    %v1792 = vsub.f32 %v1632, %v1706
    %v1793 = vsub.f32 %v1634, %v1743
    %v1794 = vsub.f32 %v1636, %v1706
    %v1795 = vsub.f32 %v1638, %v1743
    %v1796 = vsub.f32 %v1642, %v1706
    %v1797 = vsub.f32 %v1644, %v1743
    %v1798 = vsub.f32 %v1646, %v1706
    %v1799 = vsub.f32 %v1648, %v1743
    %v1800 = vsub.f32 %v1652, %v1706
    %v1801 = vsub.f32 %v1654, %v1743
    %v1802 = vsub.f32 %v1656, %v1706
    %v1803 = vsub.f32 %v1658, %v1743
    %v1804 = vsub.f32 %v1662, %v1706
    %v1805 = vsub.f32 %v1664, %v1743
    %v1806 = vsub.f32 %v1666, %v1706
    %v1807 = vsub.f32 %v1668, %v1743
    %v1808 = vmul.f32 %v1744, 1.442695
    %v1809 = vpow.pop %v1808
    %v1810 = vmul.f32 %v1745, 1.442695
    %v1811 = vpow.pop %v1810
    %v1812 = vmul.f32 %v1746, 1.442695
    %v1813 = vpow.pop %v1812
    %v1814 = vmul.f32 %v1747, 1.442695
    %v1815 = vpow.pop %v1814
    %v1816 = vmul.f32 %v1748, 1.442695
    %v1817 = vpow.pop %v1816
    %v1818 = vmul.f32 %v1749, 1.442695
    %v1819 = vpow.pop %v1818
    %v1820 = vmul.f32 %v1750, 1.442695
    %v1821 = vpow.pop %v1820
    %v1822 = vmul.f32 %v1751, 1.442695
    %v1823 = vpow.pop %v1822
    %v1824 = vmul.f32 %v1752, 1.442695
    %v1825 = vpow.pop %v1824
    %v1826 = vmul.f32 %v1753, 1.442695
    %v1827 = vpow.pop %v1826
    %v1828 = vmul.f32 %v1754, 1.442695
    %v1829 = vpow.pop %v1828
    %v1830 = vmul.f32 %v1755, 1.442695
    %v1831 = vpow.pop %v1830
    %v1832 = vmul.f32 %v1756, 1.442695
    %v1833 = vpow.pop %v1832
    %v1834 = vmul.f32 %v1757, 1.442695
    %v1835 = vpow.pop %v1834
    %v1836 = vmul.f32 %v1758, 1.442695
    %v1837 = vpow.pop %v1836
    %v1838 = vmul.f32 %v1759, 1.442695
    %v1839 = vpow.pop %v1838
    %v1840 = vmul.f32 %v1760, 1.442695
    %v1841 = vpow.pop %v1840
    %v1842 = vmul.f32 %v1761, 1.442695
    %v1843 = vpow.pop %v1842
    %v1844 = vmul.f32 %v1762, 1.442695
    %v1845 = vpow.pop %v1844
    %v1846 = vmul.f32 %v1763, 1.442695
    %v1847 = vpow.pop %v1846
    %v1848 = vmul.f32 %v1764, 1.442695
    %v1849 = vpow.pop %v1848
    %v1850 = vmul.f32 %v1765, 1.442695
    %v1851 = vpow.pop %v1850
    %v1852 = vmul.f32 %v1766, 1.442695
    %v1853 = vpow.pop %v1852
    %v1854 = vmul.f32 %v1767, 1.442695
    %v1855 = vpow.pop %v1854
    %v1856 = vmul.f32 %v1768, 1.442695
    %v1857 = vpow.pop %v1856
    %v1858 = vmul.f32 %v1769, 1.442695
    %v1859 = vpow.pop %v1858
    %v1860 = vmul.f32 %v1770, 1.442695
    %v1861 = vpow.pop %v1860
    %v1862 = vmul.f32 %v1771, 1.442695
    %v1863 = vpow.pop %v1862
    %v1864 = vmul.f32 %v1772, 1.442695
    %v1865 = vpow.pop %v1864
    %v1866 = vmul.f32 %v1773, 1.442695
    %v1867 = vpow.pop %v1866
    %v1868 = vmul.f32 %v1774, 1.442695
    %v1869 = vpow.pop %v1868
    %v1870 = vmul.f32 %v1775, 1.442695
    %v1871 = vpow.pop %v1870
    %v1872 = vmul.f32 %v1776, 1.442695
    %v1873 = vpow.pop %v1872
    %v1874 = vmul.f32 %v1777, 1.442695
    %v1875 = vpow.pop %v1874
    %v1876 = vmul.f32 %v1778, 1.442695
    %v1877 = vpow.pop %v1876
    %v1878 = vmul.f32 %v1779, 1.442695
    %v1879 = vpow.pop %v1878
    %v1880 = vmul.f32 %v1780, 1.442695
    %v1881 = vpow.pop %v1880
    %v1882 = vmul.f32 %v1781, 1.442695
    %v1883 = vpow.pop %v1882
    %v1884 = vmul.f32 %v1782, 1.442695
    %v1885 = vpow.pop %v1884
    %v1886 = vmul.f32 %v1783, 1.442695
    %v1887 = vpow.pop %v1886
    %v1888 = vmul.f32 %v1784, 1.442695
    %v1889 = vpow.pop %v1888
    %v1890 = vmul.f32 %v1785, 1.442695
    %v1891 = vpow.pop %v1890
    %v1892 = vmul.f32 %v1786, 1.442695
    %v1893 = vpow.pop %v1892
    %v1894 = vmul.f32 %v1787, 1.442695
    %v1895 = vpow.pop %v1894
    %v1896 = vmul.f32 %v1788, 1.442695
    %v1897 = vpow.pop %v1896
    %v1898 = vmul.f32 %v1789, 1.442695
    %v1899 = vpow.pop %v1898
    %v1900 = vmul.f32 %v1790, 1.442695
    %v1901 = vpow.pop %v1900
    %v1902 = vmul.f32 %v1791, 1.442695
    %v1903 = vpow.pop %v1902
    %v1904 = vmul.f32 %v1792, 1.442695
    %v1905 = vpow.pop %v1904
    %v1906 = vmul.f32 %v1793, 1.442695
    %v1907 = vpow.pop %v1906
    %v1908 = vmul.f32 %v1794, 1.442695
    %v1909 = vpow.pop %v1908
    %v1910 = vmul.f32 %v1795, 1.442695
    %v1911 = vpow.pop %v1910
    %v1912 = vmul.f32 %v1796, 1.442695
    %v1913 = vpow.pop %v1912
    %v1914 = vmul.f32 %v1797, 1.442695
    %v1915 = vpow.pop %v1914
    %v1916 = vmul.f32 %v1798, 1.442695
    %v1917 = vpow.pop %v1916
    %v1918 = vmul.f32 %v1799, 1.442695
    %v1919 = vpow.pop %v1918
    %v1920 = vmul.f32 %v1800, 1.442695
    %v1921 = vpow.pop %v1920
    %v1922 = vmul.f32 %v1801, 1.442695
    %v1923 = vpow.pop %v1922
    %v1924 = vmul.f32 %v1802, 1.442695
    %v1925 = vpow.pop %v1924
    %v1926 = vmul.f32 %v1803, 1.442695
    %v1927 = vpow.pop %v1926
    %v1928 = vmul.f32 %v1804, 1.442695
    %v1929 = vpow.pop %v1928
    %v1930 = vmul.f32 %v1805, 1.442695
    %v1931 = vpow.pop %v1930
    %v1932 = vmul.f32 %v1806, 1.442695
    %v1933 = vpow.pop %v1932
    %v1934 = vmul.f32 %v1807, 1.442695
    %v1935 = vpow.pop %v1934
    %v1936 = vadd.f32 %v1809, %v1813
    %v1937 = vadd.f32 %v1936, %v1817
    %v1938 = vadd.f32 %v1937, %v1821
    %v1939 = vadd.f32 %v1938, %v1825
    %v1940 = vadd.f32 %v1939, %v1829
    %v1941 = vadd.f32 %v1940, %v1833
    %v1942 = vadd.f32 %v1941, %v1837
    %v1943 = vadd.f32 %v1942, %v1841
    %v1944 = vadd.f32 %v1943, %v1845
    %v1945 = vadd.f32 %v1944, %v1849
    %v1946 = vadd.f32 %v1945, %v1853
    %v1947 = vadd.f32 %v1946, %v1857
    %v1948 = vadd.f32 %v1947, %v1861
    %v1949 = vadd.f32 %v1948, %v1865
    %v1950 = vadd.f32 %v1949, %v1869
    %v1951 = vadd.f32 %v1950, %v1873
    %v1952 = vadd.f32 %v1951, %v1877
    %v1953 = vadd.f32 %v1952, %v1881
    %v1954 = vadd.f32 %v1953, %v1885
    %v1955 = vadd.f32 %v1954, %v1889
    %v1956 = vadd.f32 %v1955, %v1893
    %v1957 = vadd.f32 %v1956, %v1897
    %v1958 = vadd.f32 %v1957, %v1901
    %v1959 = vadd.f32 %v1958, %v1905
    %v1960 = vadd.f32 %v1959, %v1909
    %v1961 = vadd.f32 %v1960, %v1913
    %v1962 = vadd.f32 %v1961, %v1917
    %v1963 = vadd.f32 %v1962, %v1921
    %v1964 = vadd.f32 %v1963, %v1925
    %v1965 = vadd.f32 %v1964, %v1929
    %v1966 = vadd.f32 %v1965, %v1933
    %v1967 = vrot.slane %v1966, 4
    %v1968 = vadd.f32 %v1966, %v1967
    %v1969 = vrot.slane %v1968, 2
    %v1970 = vadd.f32 %v1968, %v1969
    %v1971 = vrot.slane %v1970, 1
    %v1972 = vadd.f32 %v1970, %v1971
    %v1973 = vadd.f32 %v1811, %v1815
    %v1974 = vadd.f32 %v1973, %v1819
    %v1975 = vadd.f32 %v1974, %v1823
    %v1976 = vadd.f32 %v1975, %v1827
    %v1977 = vadd.f32 %v1976, %v1831
    %v1978 = vadd.f32 %v1977, %v1835
    %v1979 = vadd.f32 %v1978, %v1839
    %v1980 = vadd.f32 %v1979, %v1843
    %v1981 = vadd.f32 %v1980, %v1847
    %v1982 = vadd.f32 %v1981, %v1851
    %v1983 = vadd.f32 %v1982, %v1855
    %v1984 = vadd.f32 %v1983, %v1859
    %v1985 = vadd.f32 %v1984, %v1863
    %v1986 = vadd.f32 %v1985, %v1867
    %v1987 = vadd.f32 %v1986, %v1871
    %v1988 = vadd.f32 %v1987, %v1875
    %v1989 = vadd.f32 %v1988, %v1879
    %v1990 = vadd.f32 %v1989, %v1883
    %v1991 = vadd.f32 %v1990, %v1887
    %v1992 = vadd.f32 %v1991, %v1891
    %v1993 = vadd.f32 %v1992, %v1895
    %v1994 = vadd.f32 %v1993, %v1899
    %v1995 = vadd.f32 %v1994, %v1903
    %v1996 = vadd.f32 %v1995, %v1907
    %v1997 = vadd.f32 %v1996, %v1911
    %v1998 = vadd.f32 %v1997, %v1915
    %v1999 = vadd.f32 %v1998, %v1919
    %v2000 = vadd.f32 %v1999, %v1923
    %v2001 = vadd.f32 %v2000, %v1927
    %v2002 = vadd.f32 %v2001, %v1931
    %v2003 = vadd.f32 %v2002, %v1935
    %v2004 = vrot.slane %v2003, 4
    %v2005 = vadd.f32 %v2003, %v2004
    %v2006 = vrot.slane %v2005, 2
    %v2007 = vadd.f32 %v2005, %v2006
    %v2008 = vrot.slane %v2007, 1
    %v2009 = vadd.f32 %v2007, %v2008
    %v2010 = vrcp.pop %v1972
    %v2011 = vrcp.pop %v2009
    %v2012 = vmul.f32 %v1809, %v2010
    %v2013 = vmul.f32 %v1811, %v2011
    %v2014 = vmul.f32 %v1813, %v2010
    %v2015 = vmul.f32 %v1815, %v2011
    %v2016 = vmul.f32 %v1817, %v2010
    %v2017 = vmul.f32 %v1819, %v2011
    %v2018 = vmul.f32 %v1821, %v2010
    %v2019 = vmul.f32 %v1823, %v2011
    %v2020 = vmul.f32 %v1825, %v2010
    %v2021 = vmul.f32 %v1827, %v2011
    %v2022 = vmul.f32 %v1829, %v2010
    %v2023 = vmul.f32 %v1831, %v2011
    %v2024 = vmul.f32 %v1833, %v2010
    %v2025 = vmul.f32 %v1835, %v2011
    %v2026 = vmul.f32 %v1837, %v2010
    %v2027 = vmul.f32 %v1839, %v2011
    %v2028 = vmul.f32 %v1841, %v2010
    %v2029 = vmul.f32 %v1843, %v2011
    %v2030 = vmul.f32 %v1845, %v2010
    %v2031 = vmul.f32 %v1847, %v2011
    %v2032 = vmul.f32 %v1849, %v2010
    %v2033 = vmul.f32 %v1851, %v2011
    %v2034 = vmul.f32 %v1853, %v2010
    %v2035 = vmul.f32 %v1855, %v2011
    %v2036 = vmul.f32 %v1857, %v2010
    %v2037 = vmul.f32 %v1859, %v2011
    %v2038 = vmul.f32 %v1861, %v2010
    %v2039 = vmul.f32 %v1863, %v2011
    %v2040 = vmul.f32 %v1865, %v2010
    %v2041 = vmul.f32 %v1867, %v2011
    %v2042 = vmul.f32 %v1869, %v2010
    %v2043 = vmul.f32 %v1871, %v2011
    %v2044 = vmul.f32 %v1873, %v2010
    %v2045 = vmul.f32 %v1875, %v2011
    %v2046 = vmul.f32 %v1877, %v2010
    %v2047 = vmul.f32 %v1879, %v2011
    %v2048 = vmul.f32 %v1881, %v2010
    %v2049 = vmul.f32 %v1883, %v2011
    %v2050 = vmul.f32 %v1885, %v2010
    %v2051 = vmul.f32 %v1887, %v2011
    %v2052 = vmul.f32 %v1889, %v2010
    %v2053 = vmul.f32 %v1891, %v2011
    %v2054 = vmul.f32 %v1893, %v2010
    %v2055 = vmul.f32 %v1895, %v2011
    %v2056 = vmul.f32 %v1897, %v2010
    %v2057 = vmul.f32 %v1899, %v2011
    %v2058 = vmul.f32 %v1901, %v2010
    %v2059 = vmul.f32 %v1903, %v2011
    %v2060 = vmul.f32 %v1905, %v2010
    %v2061 = vmul.f32 %v1907, %v2011
    %v2062 = vmul.f32 %v1909, %v2010
    %v2063 = vmul.f32 %v1911, %v2011
    %v2064 = vmul.f32 %v1913, %v2010
    %v2065 = vmul.f32 %v1915, %v2011
    %v2066 = vmul.f32 %v1917, %v2010
    %v2067 = vmul.f32 %v1919, %v2011
    %v2068 = vmul.f32 %v1921, %v2010
    %v2069 = vmul.f32 %v1923, %v2011
    %v2070 = vmul.f32 %v1925, %v2010
    %v2071 = vmul.f32 %v1927, %v2011
    %v2072 = vmul.f32 %v1929, %v2010
    %v2073 = vmul.f32 %v1931, %v2011
    %v2074 = vmul.f32 %v1933, %v2010
    %v2075 = vmul.f32 %v1935, %v2011
    %2076 = vst [vmem:[#allocation9] sm:$0xff] %v2012
    %2077 = vst [vmem:[#allocation9 + $0x8] sm:$0xff] %v2013
    %2078 = vst [vmem:[#allocation9 + $0x10] sm:$0xff] %v2014
    %2079 = vst [vmem:[#allocation9 + $0x18] sm:$0xff] %v2015
    %2080 = vst [vmem:[#allocation9 + $0x20] sm:$0xff] %v2016
    %2081 = vst [vmem:[#allocation9 + $0x28] sm:$0xff] %v2017
    %2082 = vst [vmem:[#allocation9 + $0x30] sm:$0xff] %v2018
    %2083 = vst [vmem:[#allocation9 + $0x38] sm:$0xff] %v2019
    %2084 = vst [vmem:[#allocation9 + $0x40] sm:$0xff] %v2020
    %2085 = vst [vmem:[#allocation9 + $0x48] sm:$0xff] %v2021
    %2086 = vst [vmem:[#allocation9 + $0x50] sm:$0xff] %v2022
    %2087 = vst [vmem:[#allocation9 + $0x58] sm:$0xff] %v2023
    %2088 = vst [vmem:[#allocation9 + $0x60] sm:$0xff] %v2024
    %2089 = vst [vmem:[#allocation9 + $0x68] sm:$0xff] %v2025
    %2090 = vst [vmem:[#allocation9 + $0x70] sm:$0xff] %v2026
    %2091 = vst [vmem:[#allocation9 + $0x78] sm:$0xff] %v2027
    %2092 = vst [vmem:[#allocation9 + $0x80] sm:$0xff] %v2028
    %2093 = vst [vmem:[#allocation9 + $0x88] sm:$0xff] %v2029
    %2094 = vst [vmem:[#allocation9 + $0x90] sm:$0xff] %v2030
    %2095 = vst [vmem:[#allocation9 + $0x98] sm:$0xff] %v2031
    %2096 = vst [vmem:[#allocation9 + $0xa0] sm:$0xff] %v2032
    %2097 = vst [vmem:[#allocation9 + $0xa8] sm:$0xff] %v2033
    %2098 = vst [vmem:[#allocation9 + $0xb0] sm:$0xff] %v2034
    %2099 = vst [vmem:[#allocation9 + $0xb8] sm:$0xff] %v2035
    %2100 = vst [vmem:[#allocation9 + $0xc0] sm:$0xff] %v2036
    %2101 = vst [vmem:[#allocation9 + $0xc8] sm:$0xff] %v2037
    %2102 = vst [vmem:[#allocation9 + $0xd0] sm:$0xff] %v2038
    %2103 = vst [vmem:[#allocation9 + $0xd8] sm:$0xff] %v2039
    %2104 = vst [vmem:[#allocation9 + $0xe0] sm:$0xff] %v2040
    %2105 = vst [vmem:[#allocation9 + $0xe8] sm:$0xff] %v2041
    %2106 = vst [vmem:[#allocation9 + $0xf0] sm:$0xff] %v2042
    %2107 = vst [vmem:[#allocation9 + $0xf8] sm:$0xff] %v2043
    %2108 = vst [vmem:[#allocation9 + $0x100] sm:$0xff] %v2044
    %2109 = vst [vmem:[#allocation9 + $0x108] sm:$0xff] %v2045
    %2110 = vst [vmem:[#allocation9 + $0x110] sm:$0xff] %v2046
    %2111 = vst [vmem:[#allocation9 + $0x118] sm:$0xff] %v2047
    %2112 = vst [vmem:[#allocation9 + $0x120] sm:$0xff] %v2048
    %2113 = vst [vmem:[#allocation9 + $0x128] sm:$0xff] %v2049
    %2114 = vst [vmem:[#allocation9 + $0x130] sm:$0xff] %v2050
    %2115 = vst [vmem:[#allocation9 + $0x138] sm:$0xff] %v2051
    %2116 = vst [vmem:[#allocation9 + $0x140] sm:$0xff] %v2052
    %2117 = vst [vmem:[#allocation9 + $0x148] sm:$0xff] %v2053
    %2118 = vst [vmem:[#allocation9 + $0x150] sm:$0xff] %v2054
    %2119 = vst [vmem:[#allocation9 + $0x158] sm:$0xff] %v2055
    %2120 = vst [vmem:[#allocation9 + $0x160] sm:$0xff] %v2056
    %2121 = vst [vmem:[#allocation9 + $0x168] sm:$0xff] %v2057
    %2122 = vst [vmem:[#allocation9 + $0x170] sm:$0xff] %v2058
    %2123 = vst [vmem:[#allocation9 + $0x178] sm:$0xff] %v2059
    %2124 = vst [vmem:[#allocation9 + $0x180] sm:$0xff] %v2060
    %2125 = vst [vmem:[#allocation9 + $0x188] sm:$0xff] %v2061
    %2126 = vst [vmem:[#allocation9 + $0x190] sm:$0xff] %v2062
    %2127 = vst [vmem:[#allocation9 + $0x198] sm:$0xff] %v2063
    %2128 = vst [vmem:[#allocation9 + $0x1a0] sm:$0xff] %v2064
    %2129 = vst [vmem:[#allocation9 + $0x1a8] sm:$0xff] %v2065
    %2130 = vst [vmem:[#allocation9 + $0x1b0] sm:$0xff] %v2066
    %2131 = vst [vmem:[#allocation9 + $0x1b8] sm:$0xff] %v2067
    %2132 = vst [vmem:[#allocation9 + $0x1c0] sm:$0xff] %v2068
    %2133 = vst [vmem:[#allocation9 + $0x1c8] sm:$0xff] %v2069
    %2134 = vst [vmem:[#allocation9 + $0x1d0] sm:$0xff] %v2070
    %2135 = vst [vmem:[#allocation9 + $0x1d8] sm:$0xff] %v2071
    %2136 = vst [vmem:[#allocation9 + $0x1e0] sm:$0xff] %v2072
    %2137 = vst [vmem:[#allocation9 + $0x1e8] sm:$0xff] %v2073
    %2138 = vst [vmem:[#allocation9 + $0x1f0] sm:$0xff] %v2074
    %2139 = vst [vmem:[#allocation9 + $0x1f8] sm:$0xff] %v2075
    // Predicated region
    $region42: #{tpu_custom_call.1} parent=1 // pred_check
      _
    $region43: #{tpu_custom_call.1} parent=1 // pred_check_branch
      %2141 = sbr.rel (0) target = $region45
    $region44: #{tpu_custom_call.1} parent=1 // pred_region
      %s2143 = ssub.s32 8192, 8192
      %2144 = vsyncadd [#allocation5], %s2143
      %s2145 = sshll.u32 [#allocation9], 4
      %s2146 = int_to_ptr.vmem [resolvable:$true] %s2145
      %2151 = dma.vmem_to_hbm [thread:$0]  %s2146, 8192, %s7, [#allocation5], 256, 256, 16
    $region45: #{tpu_custom_call.1} parent=1 // pred_fallthru
      _
    // Predicated region
    $region46: #{tpu_custom_call.1} parent=1 // pred_check
      _
    $region47: #{tpu_custom_call.1} parent=1 // pred_check_branch
      %2153 = sbr.rel (0) target = $region49
    $region48: #{tpu_custom_call.1} parent=1 // pred_region
      %2154 = dma.done [#allocation5], 8192
    $region49: #{tpu_custom_call.1} parent=1 // pred_fallthru
      _
    %2155 = vsyncpa [#allocation4], 1
    %2156 = vsyncpa [#allocation7], 1
    %2157 = vsyncpa [#allocation5], 1

</llo_original>
